<compile_context>
chip_gen: v5e
topology: v5e:2x2
jax: 0.10.0
libtpu: 0.0.40
codegen_flags: <defaults>
</compile_context>

<pallas_src>
import functools

import jax
import jax.numpy as jnp
from jax.experimental import pallas as pl
from jax.experimental.pallas import tpu as pltpu


def _round_up(x, m):
    return (x + m - 1) // m * m


def _pad_time(a, t_round):
    t = a.shape[-1]
    if t == t_round:
        return a
    pad = [(0, 0)] * (a.ndim - 1) + [(0, t_round - t)]
    return jnp.pad(a, pad)


def _vmem_capacity_bytes():
    try:
        return int(pltpu.get_tpu_info().vmem_capacity_bytes)
    except Exception:
        return 64 << 20                      # assume the smallest (v7x) if query fails


def _mosaic_params(vmem_bytes):
    # Raise the scoped VMEM limit only when the working set needs it (v5e's
    # scoped default is 16 MiB); never exceed the physical capacity (64 MiB v7x).
    limit = None
    if vmem_bytes > (12 << 20):
        cap = _vmem_capacity_bytes()
        limit = min(int(vmem_bytes * 5 // 4) + (4 << 20), cap - (4 << 20))
    return pltpu.CompilerParams(dimension_semantics=("parallel",),
                                vmem_limit_bytes=limit)


# --------------------------------------------------------------------------
# Fused stage kernel
# --------------------------------------------------------------------------

def _fused_stage_kernel(x_ref, mask_ref, w_in_ref, b_in_ref,
                        w_dil_ref, b_dil_ref, w_1x1_ref, b_1x1_ref,
                        w_out_ref, b_out_ref,
                        logits_ref, feat_ref, hpad_ref,
                        *, num_layers, kernel_size, t_len, left_pad, f_maps,
                        gated):
    k = kernel_size
    half = k // 2
    m = mask_ref[...]                                        # (1, T) f32

    # Input 1x1 conv + mask (x and weights bf16, f32 accumulation).
    h = jnp.dot(w_in_ref[...], x_ref[...],
                preferred_element_type=jnp.float32) + b_in_ref[...]
    h = h * m                                                # (F, T) f32

    # Zero the halo scratch once per grid step; the halo columns outside the
    # h window are never written afterwards, so taps that read past the
    # sequence read zeros -- exactly the conv's own zero padding.
    hpad_ref[...] = jnp.zeros_like(hpad_ref)

    for l in range(num_layers):                              # static unrolled loop
        dilation = 2 ** l
        # Stage the current activation (bf16 MXU operand) at a 128-aligned
        # offset inside the shared halo buffer.
        hpad_ref[:, left_pad:left_pad + t_len] = h.astype(jnp.bfloat16)

        # Dilated conv (+ gate) = K accumulating MXU matmuls over shifted taps.
        acc = b_dil_ref[l]                                   # (rows, 1) f32
        for kk in range(k):
            off = left_pad + (kk - half) * dilation
            tap = hpad_ref[:, off:off + t_len]               # (F, T) bf16
            acc = acc + jnp.dot(w_dil_ref[l * k + kk], tap,
                                preferred_element_type=jnp.float32)

        if gated:
            conv = acc[:f_maps]
            gate = jax.nn.sigmoid(acc[f_maps:])
            mid = conv * gate                                # gating in f32
        else:
            mid = jnp.maximum(acc, 0.0)                      # base_dr: ReLU pre-1x1
        # ch_dropout / dropout are identity in eval mode.
        out = jnp.dot(w_1x1_ref[l], mid.astype(jnp.bfloat16),
                      preferred_element_type=jnp.float32) + b_1x1_ref[l]
        if gated:
            out = jnp.maximum(out, 0.0)                      # gated: ReLU post-1x1
        h = (h + out) * m                                    # residual add in f32

    feat_ref[...] = (h * m).astype(feat_ref.dtype)
    logits = jnp.dot(w_out_ref[...], h.astype(jnp.bfloat16),
                     preferred_element_type=jnp.float32) + b_out_ref[...]
    logits_ref[...] = (logits * m).astype(logits_ref.dtype)


# --------------------------------------------------------------------------
# One-time parameter packing (hoisted out of the per-call path)
# --------------------------------------------------------------------------

def prepare_params(params, *, layer_type, kernel_size, num_layers):
    """Stack all layers, split dilated-conv weights per tap, cast to bf16."""
    k = kernel_size
    gated = layer_type == "gated"
    f = params["w_in"].shape[0]

    def per_tap(lp):
        w = (jnp.concatenate([lp["w_conv"], lp["w_gate"]], axis=0)
             if gated else lp["w_conv"])                     # (rows, Cin, K)
        return jnp.transpose(w, (2, 0, 1))                   # (K, rows, Cin)

    w_dil, b_dil, w_1x1, b_1x1 = [], [], [], []
    for lp in params["layers"][:num_layers]:
        w_dil.append(per_tap(lp))
        if gated:
            b_dil.append(jnp.concatenate([lp["b_conv"], lp["b_gate"]])[:, None])
        else:
            b_dil.append(lp["b_conv"][:, None])
        w_1x1.append(lp["w_1x1"])
        b_1x1.append(lp["b_1x1"][:, None])

    rows = 2 * f if gated else f
    return {
        "w_in": params["w_in"].astype(jnp.bfloat16),
        "b_in": params["b_in"][:, None].astype(jnp.float32),
        "w_dil": jnp.stack(w_dil).reshape(num_layers * k, rows, f).astype(jnp.bfloat16),
        "b_dil": jnp.stack(b_dil).astype(jnp.float32),
        "w_1x1": jnp.stack(w_1x1).astype(jnp.bfloat16),
        "b_1x1": jnp.stack(b_1x1).astype(jnp.float32),
        "w_out": params["w_out"].astype(jnp.bfloat16),
        "b_out": params["b_out"][:, None].astype(jnp.float32),
    }


# --------------------------------------------------------------------------
# Wrapper
# --------------------------------------------------------------------------

def single_stage_model(x, mask, packed, *, layer_type, kernel_size, num_layers):
    """x: (N, dim, T) f32, mask: (N, 1, T) -> (logits (N, C, T), feats (N, F, T)).
    Eval-mode (dropout = identity) semantics of SingleStageModel.forward."""
    assert kernel_size % 2 == 1, "same-padding dilated conv needs odd kernel_size"
    n, dim, t = x.shape
    f = packed["w_in"].shape[0]
    ncls = packed["w_out"].shape[0]
    rows = packed["w_dil"].shape[1]
    k = kernel_size
    gated = layer_type == "gated"

    # Zero-extending T together with a zero-extended mask is equivalent to the
    # convs' own zero padding (h is re-masked every layer, so it stays exactly
    # 0 beyond T); results at positions < T are unchanged.
    t_pad = _round_up(max(t, 128), 128)
    xr = _pad_time(x, t_pad).astype(jnp.bfloat16)            # bf16 halves x traffic
    mr = _pad_time(mask, t_pad).astype(jnp.float32)

    max_pad = (k // 2) * (2 ** (num_layers - 1))
    left_pad = _round_up(max_pad, 128)                       # lane-aligned h window
    w_pad = _round_up(left_pad + t_pad + max_pad, 128)

    # TODO(synk): if dim*T (e.g. dim=2048 I3D features over very long videos)
    # or num_f_maps*T exceed VMEM, split the input 1x1 into a T-tiled call
    # and/or chunk T with receptive-field halos; whole-T residency is used here.
    vmem_bytes = (
        2 * (dim * t_pad * 2 + t_pad * 4)                            # x + mask (dbl-buf)
        + 2 * ((ncls + f) * t_pad * 4)                               # outputs (dbl-buf)
        + 2 * 2 * (f * dim + num_layers * k * rows * f
                   + num_layers * f * f + ncls * f)                  # bf16 weights
        + f * w_pad * 2                                              # halo scratch
        + (4 * f + rows) * t_pad * 4)                                # live h/acc/out

    kern = functools.partial(
        _fused_stage_kernel, num_layers=num_layers, kernel_size=k,
        t_len=t_pad, left_pad=left_pad, f_maps=f, gated=gated)

    logits, feats = pl.pallas_call(
        kern,
        out_shape=(jax.ShapeDtypeStruct((n, ncls, t_pad), jnp.float32),
                   jax.ShapeDtypeStruct((n, f, t_pad), jnp.float32)),
        grid=(n,),
        in_specs=[
            pl.BlockSpec((None, dim, t_pad), lambda i: (i, 0, 0)),        # x
            pl.BlockSpec((None, 1, t_pad), lambda i: (i, 0, 0)),          # mask
            pl.BlockSpec((f, dim), lambda i: (0, 0)),                     # w_in
            pl.BlockSpec((f, 1), lambda i: (0, 0)),                       # b_in
            pl.BlockSpec((num_layers * k, rows, f), lambda i: (0, 0, 0)), # w_dil
            pl.BlockSpec((num_layers, rows, 1), lambda i: (0, 0, 0)),     # b_dil
            pl.BlockSpec((num_layers, f, f), lambda i: (0, 0, 0)),        # w_1x1
            pl.BlockSpec((num_layers, f, 1), lambda i: (0, 0, 0)),        # b_1x1
            pl.BlockSpec((ncls, f), lambda i: (0, 0)),                    # w_out
            pl.BlockSpec((ncls, 1), lambda i: (0, 0)),                    # b_out
        ],
        out_specs=(pl.BlockSpec((None, ncls, t_pad), lambda i: (i, 0, 0)),
                   pl.BlockSpec((None, f, t_pad), lambda i: (i, 0, 0))),
        scratch_shapes=[pltpu.VMEM((f, w_pad), jnp.bfloat16)],
        compiler_params=_mosaic_params(vmem_bytes),
    )(xr, mr, packed["w_in"], packed["b_in"], packed["w_dil"], packed["b_dil"],
      packed["w_1x1"], packed["b_1x1"], packed["w_out"], packed["b_out"])

    return logits[..., :t], feats[..., :t]


# --------------------------------------------------------------------------
# Plain-JAX reference (eval-mode PyTorch semantics)
# --------------------------------------------------------------------------

def _reference(x, mask, params, *, layer_type, kernel_size, num_layers):
    dn = ("NCH", "OIH", "NCH")

    def conv1d(inp, w, b, dil=1, p=0):
        y = jax.lax.conv_general_dilated(
            inp, w, window_strides=(1,), padding=[(p, p)],
            rhs_dilation=(dil,), dimension_numbers=dn)
        return y + b[None, :, None]

    h = conv1d(x, params["w_in"][:, :, None], params["b_in"]) * mask
    for i in range(num_layers):
        lp = params["layers"][i]
        dil = 2 ** i
        p = (kernel_size // 2) * dil
        conv = conv1d(h, lp["w_conv"], lp["b_conv"], dil, p)
        if layer_type == "gated":
            gate = jax.nn.sigmoid(conv1d(h, lp["w_gate"], lp["b_gate"], dil, p))
            out = conv * gate
            out = conv1d(out, lp["w_1x1"][:, :, None], lp["b_1x1"])
            out = jax.nn.relu(out)
        else:
            out = jax.nn.relu(conv)
            out = conv1d(out, lp["w_1x1"][:, :, None], lp["b_1x1"])
        h = (h + out) * mask
    feats = h * mask
    logits = conv1d(h, params["w_out"][:, :, None], params["b_out"]) * mask
    return logits, feats


if __name__ == "__main__":
    # Small config consistent with SingleStageModel:
    #   dim=8 input features, num_f_maps=8, num_classes=4, kernel_size=3,
    #   num_layers=3 (dilations 1, 2, 4), batch=2, T=16.
    # TODO(synk): training-mode Dropout / Dropout1d (random masking) is not
    # implemented; eval-mode identity semantics are used.
    N, DIM, F, NCLS, T = 2, 8, 8, 4, 16
    K, NUM_LAYERS = 3, 3

    key = jax.random.PRNGKey(0)
    keys = iter(jax.random.split(key, 8 + 6 * NUM_LAYERS))

    def rnd(shape, scale=0.1):
        return scale * jax.random.normal(next(keys), shape, jnp.float32)

    params = {
        "w_in": rnd((F, DIM)), "b_in": rnd((F,)),
        "w_out": rnd((NCLS, F)), "b_out": rnd((NCLS,)),
        "layers": [
            {"w_conv": rnd((F, F, K)), "b_conv": rnd((F,)),
             "w_gate": rnd((F, F, K)), "b_gate": rnd((F,)),
             "w_1x1": rnd((F, F)), "b_1x1": rnd((F,))}
            for _ in range(NUM_LAYERS)
        ],
    }

    x = jax.random.normal(next(keys), (N, DIM, T), jnp.float32)
    mask = jnp.ones((N, 1, T), jnp.float32)
    mask = mask.at[1, :, -4:].set(0.0)        # batch element 1: last 4 steps padded

    for layer_type in ("gated", "base_dr"):
        packed = prepare_params(params, layer_type=layer_type,
                                kernel_size=K, num_layers=NUM_LAYERS)
        logits, feats = jax.block_until_ready(
            single_stage_model(x, mask, packed, layer_type=layer_type,
                               kernel_size=K, num_layers=NUM_LAYERS))
        ref_logits, ref_feats = _reference(x, mask, params, layer_type=layer_type,
                                           kernel_size=K, num_layers=NUM_LAYERS)
        assert logits.shape == (N, NCLS, T) and feats.shape == (N, F, T)
        # bf16 MXU operands with f32 accumulation -> ~1e-2 tolerance.
        assert jnp.allclose(logits, ref_logits, rtol=2e-2, atol=2e-2), layer_type
        assert jnp.allclose(feats, ref_feats, rtol=2e-2, atol=2e-2), layer_type

    print("KERNEL_OK")
</pallas_src>

<mosaic_0001>
module attributes {stable_mosaic.version = 11 : i64} {
  func.func @_fused_stage_kernel(%arg0: i32, %arg1: memref<1x8x128xbf16, #tpu.memory_space<vmem>>, %arg2: memref<1x1x128xf32, #tpu.memory_space<vmem>>, %arg3: memref<8x8xbf16, #tpu.memory_space<vmem>>, %arg4: memref<8x1xf32, #tpu.memory_space<vmem>>, %arg5: memref<9x16x8xbf16, #tpu.memory_space<vmem>>, %arg6: memref<3x16x1xf32, #tpu.memory_space<vmem>>, %arg7: memref<3x8x8xbf16, #tpu.memory_space<vmem>>, %arg8: memref<3x8x1xf32, #tpu.memory_space<vmem>>, %arg9: memref<4x8xbf16, #tpu.memory_space<vmem>>, %arg10: memref<4x1xf32, #tpu.memory_space<vmem>>, %arg11: memref<1x4x128xf32, #tpu.memory_space<vmem>>, %arg12: memref<1x8x128xf32, #tpu.memory_space<vmem>>, %arg13: memref<8x384xbf16, #tpu.memory_space<vmem>>) attributes {dimension_semantics = [#tpu.dimension_semantics<parallel>], iteration_bounds = array<i64: 2>, scalar_prefetch = 0 : i64, scratch_operands = 1 : i64, tpu.core_type = #tpu.core_type<tc>, window_params = [{transform_indices = @transform_0, window_bounds = array<i64: 1, 8, 128>}, {transform_indices = @transform_1, window_bounds = array<i64: 1, 1, 128>}, {pipeline_mode = #tpu.pipeline_mode<synchronous>, transform_indices = @transform_2, window_bounds = array<i64: 8, 8>}, {pipeline_mode = #tpu.pipeline_mode<synchronous>, transform_indices = @transform_3, window_bounds = array<i64: 8, 1>}, {pipeline_mode = #tpu.pipeline_mode<synchronous>, transform_indices = @transform_4, window_bounds = array<i64: 9, 16, 8>}, {pipeline_mode = #tpu.pipeline_mode<synchronous>, transform_indices = @transform_5, window_bounds = array<i64: 3, 16, 1>}, {pipeline_mode = #tpu.pipeline_mode<synchronous>, transform_indices = @transform_6, window_bounds = array<i64: 3, 8, 8>}, {pipeline_mode = #tpu.pipeline_mode<synchronous>, transform_indices = @transform_7, window_bounds = array<i64: 3, 8, 1>}, {pipeline_mode = #tpu.pipeline_mode<synchronous>, transform_indices = @transform_8, window_bounds = array<i64: 4, 8>}, {pipeline_mode = #tpu.pipeline_mode<synchronous>, transform_indices = @transform_9, window_bounds = array<i64: 4, 1>}, {transform_indices = @transform_10, window_bounds = array<i64: 1, 4, 128>}, {transform_indices = @transform_11, window_bounds = array<i64: 1, 8, 128>}]} {
    %c0 = arith.constant 0 : index
    %c0_0 = arith.constant 0 : index
    %c0_1 = arith.constant 0 : index
    %0 = vector.load %arg2[%c0, %c0_0, %c0_1] : memref<1x1x128xf32, #tpu.memory_space<vmem>>, vector<1x1x128xf32>
    %1 = vector.shape_cast %0 : vector<1x1x128xf32> to vector<1x128xf32>
    %c0_2 = arith.constant 0 : index
    %c0_3 = arith.constant 0 : index
    %2 = vector.load %arg3[%c0_2, %c0_3] : memref<8x8xbf16, #tpu.memory_space<vmem>>, vector<8x8xbf16>
    %c0_4 = arith.constant 0 : index
    %c0_5 = arith.constant 0 : index
    %c0_6 = arith.constant 0 : index
    %3 = vector.load %arg1[%c0_4, %c0_5, %c0_6] : memref<1x8x128xbf16, #tpu.memory_space<vmem>>, vector<1x8x128xbf16>
    %4 = vector.shape_cast %3 : vector<1x8x128xbf16> to vector<8x128xbf16>
    %cst = arith.constant dense<0.000000e+00> : vector<8x128xf32>
    %5 = tpu.matmul %2, %4, %cst {dimension_numbers = #tpu.dot_dimension_numbers<[1], [0], [0], [1], [0, 0, 1, 1], [], []>} : vector<8x8xbf16>, vector<8x128xbf16>, vector<8x128xf32> -> vector<8x128xf32>
    %c0_7 = arith.constant 0 : index
    %c0_8 = arith.constant 0 : index
    %6 = vector.load %arg4[%c0_7, %c0_8] : memref<8x1xf32, #tpu.memory_space<vmem>>, vector<8x1xf32>
    %7 = vector.broadcast %6 : vector<8x1xf32> to vector<8x128xf32>
    %8 = arith.addf %5, %7 : vector<8x128xf32>
    %9 = vector.broadcast %1 : vector<1x128xf32> to vector<8x128xf32>
    %10 = arith.mulf %8, %9 : vector<8x128xf32>
    %cst_9 = arith.constant 0.000000e+00 : bf16
    %11 = vector.broadcast %cst_9 : bf16 to vector<8x384xbf16>
    %c0_10 = arith.constant 0 : index
    %c0_11 = arith.constant 0 : index
    %12 = vector.load %arg13[%c0_10, %c0_11] : memref<8x384xbf16, #tpu.memory_space<vmem>>, vector<8x384xbf16>
    tpu.vector_store %arg13[%c0_10, %c0_11], %11 {strides = array<i32>} : memref<8x384xbf16, #tpu.memory_space<vmem>>, vector<8x384xbf16>,
    %13 = arith.truncf %10 : vector<8x128xf32> to vector<8x128xbf16>
    %c0_12 = arith.constant 0 : index
    %c128 = arith.constant 128 : index
    %14 = vector.load %arg13[%c0_12, %c128] : memref<8x384xbf16, #tpu.memory_space<vmem>>, vector<8x128xbf16>
    tpu.vector_store %arg13[%c0_12, %c128], %13 {strides = array<i32>} : memref<8x384xbf16, #tpu.memory_space<vmem>>, vector<8x128xbf16>,
    %c0_13 = arith.constant 0 : index
    %c0_14 = arith.constant 0 : index
    %c0_15 = arith.constant 0 : index
    %15 = vector.load %arg6[%c0_13, %c0_14, %c0_15] : memref<3x16x1xf32, #tpu.memory_space<vmem>>, vector<1x16x1xf32>
    %16 = vector.shape_cast %15 : vector<1x16x1xf32> to vector<16x1xf32>
    %c0_16 = arith.constant 0 : index
    %c127 = arith.constant 127 : index
    %17 = vector.load %arg13[%c0_16, %c127] : memref<8x384xbf16, #tpu.memory_space<vmem>>, vector<8x128xbf16>
    %c0_17 = arith.constant 0 : index
    %c0_18 = arith.constant 0 : index
    %c0_19 = arith.constant 0 : index
    %18 = vector.load %arg5[%c0_17, %c0_18, %c0_19] : memref<9x16x8xbf16, #tpu.memory_space<vmem>>, vector<1x16x8xbf16>
    %19 = vector.shape_cast %18 : vector<1x16x8xbf16> to vector<16x8xbf16>
    %cst_20 = arith.constant dense<0.000000e+00> : vector<16x128xf32>
    %20 = tpu.matmul %19, %17, %cst_20 {dimension_numbers = #tpu.dot_dimension_numbers<[1], [0], [0], [1], [0, 0, 1, 1], [], []>} : vector<16x8xbf16>, vector<8x128xbf16>, vector<16x128xf32> -> vector<16x128xf32>
    %21 = vector.broadcast %16 : vector<16x1xf32> to vector<16x128xf32>
    %22 = arith.addf %21, %20 : vector<16x128xf32>
    %c0_21 = arith.constant 0 : index
    %c128_22 = arith.constant 128 : index
    %23 = vector.load %arg13[%c0_21, %c128_22] : memref<8x384xbf16, #tpu.memory_space<vmem>>, vector<8x128xbf16>
    %c1 = arith.constant 1 : index
    %c0_23 = arith.constant 0 : index
    %c0_24 = arith.constant 0 : index
    %24 = vector.load %arg5[%c1, %c0_23, %c0_24] : memref<9x16x8xbf16, #tpu.memory_space<vmem>>, vector<1x16x8xbf16>
    %25 = vector.shape_cast %24 : vector<1x16x8xbf16> to vector<16x8xbf16>
    %cst_25 = arith.constant dense<0.000000e+00> : vector<16x128xf32>
    %26 = tpu.matmul %25, %23, %cst_25 {dimension_numbers = #tpu.dot_dimension_numbers<[1], [0], [0], [1], [0, 0, 1, 1], [], []>} : vector<16x8xbf16>, vector<8x128xbf16>, vector<16x128xf32> -> vector<16x128xf32>
    %27 = arith.addf %22, %26 : vector<16x128xf32>
    %c0_26 = arith.constant 0 : index
    %c129 = arith.constant 129 : index
    %28 = vector.load %arg13[%c0_26, %c129] : memref<8x384xbf16, #tpu.memory_space<vmem>>, vector<8x128xbf16>
    %c2 = arith.constant 2 : index
    %c0_27 = arith.constant 0 : index
    %c0_28 = arith.constant 0 : index
    %29 = vector.load %arg5[%c2, %c0_27, %c0_28] : memref<9x16x8xbf16, #tpu.memory_space<vmem>>, vector<1x16x8xbf16>
    %30 = vector.shape_cast %29 : vector<1x16x8xbf16> to vector<16x8xbf16>
    %cst_29 = arith.constant dense<0.000000e+00> : vector<16x128xf32>
    %31 = tpu.matmul %30, %28, %cst_29 {dimension_numbers = #tpu.dot_dimension_numbers<[1], [0], [0], [1], [0, 0, 1, 1], [], []>} : vector<16x8xbf16>, vector<8x128xbf16>, vector<16x128xf32> -> vector<16x128xf32>
    %32 = arith.addf %27, %31 : vector<16x128xf32>
    %33 = vector.extract_strided_slice %32 {offsets = [0, 0], sizes = [8, 128], strides = [1, 1]} : vector<16x128xf32> to vector<8x128xf32>
    %34 = vector.extract_strided_slice %32 {offsets = [8, 0], sizes = [8, 128], strides = [1, 1]} : vector<16x128xf32> to vector<8x128xf32>
    %35 = arith.negf %34 : vector<8x128xf32>
    %36 = math.exp %35 : vector<8x128xf32>
    %cst_30 = arith.constant 1.000000e+00 : f32
    %37 = vector.broadcast %cst_30 : f32 to vector<8x128xf32>
    %38 = arith.addf %37, %36 : vector<8x128xf32>
    %39 = arith.divf %37, %38 : vector<8x128xf32>
    %40 = arith.mulf %33, %39 : vector<8x128xf32>
    %c0_31 = arith.constant 0 : index
    %c0_32 = arith.constant 0 : index
    %c0_33 = arith.constant 0 : index
    %41 = vector.load %arg7[%c0_31, %c0_32, %c0_33] : memref<3x8x8xbf16, #tpu.memory_space<vmem>>, vector<1x8x8xbf16>
    %42 = vector.shape_cast %41 : vector<1x8x8xbf16> to vector<8x8xbf16>
    %43 = arith.truncf %40 : vector<8x128xf32> to vector<8x128xbf16>
    %cst_34 = arith.constant dense<0.000000e+00> : vector<8x128xf32>
    %44 = tpu.matmul %42, %43, %cst_34 {dimension_numbers = #tpu.dot_dimension_numbers<[1], [0], [0], [1], [0, 0, 1, 1], [], []>} : vector<8x8xbf16>, vector<8x128xbf16>, vector<8x128xf32> -> vector<8x128xf32>
    %c0_35 = arith.constant 0 : index
    %c0_36 = arith.constant 0 : index
    %c0_37 = arith.constant 0 : index
    %45 = vector.load %arg8[%c0_35, %c0_36, %c0_37] : memref<3x8x1xf32, #tpu.memory_space<vmem>>, vector<1x8x1xf32>
    %46 = vector.shape_cast %45 : vector<1x8x1xf32> to vector<8x1xf32>
    %47 = vector.broadcast %46 : vector<8x1xf32> to vector<8x128xf32>
    %48 = arith.addf %44, %47 : vector<8x128xf32>
    %cst_38 = arith.constant 0.000000e+00 : f32
    %49 = vector.broadcast %cst_38 : f32 to vector<8x128xf32>
    %50 = arith.maximumf %48, %49 : vector<8x128xf32>
    %51 = arith.addf %10, %50 : vector<8x128xf32>
    %52 = vector.broadcast %1 : vector<1x128xf32> to vector<8x128xf32>
    %53 = arith.mulf %51, %52 : vector<8x128xf32>
    %54 = arith.truncf %53 : vector<8x128xf32> to vector<8x128xbf16>
    %c0_39 = arith.constant 0 : index
    %c128_40 = arith.constant 128 : index
    %55 = vector.load %arg13[%c0_39, %c128_40] : memref<8x384xbf16, #tpu.memory_space<vmem>>, vector<8x128xbf16>
    tpu.vector_store %arg13[%c0_39, %c128_40], %54 {strides = array<i32>} : memref<8x384xbf16, #tpu.memory_space<vmem>>, vector<8x128xbf16>,
    %c1_41 = arith.constant 1 : index
    %c0_42 = arith.constant 0 : index
    %c0_43 = arith.constant 0 : index
    %56 = vector.load %arg6[%c1_41, %c0_42, %c0_43] : memref<3x16x1xf32, #tpu.memory_space<vmem>>, vector<1x16x1xf32>
    %57 = vector.shape_cast %56 : vector<1x16x1xf32> to vector<16x1xf32>
    %c0_44 = arith.constant 0 : index
    %c126 = arith.constant 126 : index
    %58 = vector.load %arg13[%c0_44, %c126] : memref<8x384xbf16, #tpu.memory_space<vmem>>, vector<8x128xbf16>
    %c3 = arith.constant 3 : index
    %c0_45 = arith.constant 0 : index
    %c0_46 = arith.constant 0 : index
    %59 = vector.load %arg5[%c3, %c0_45, %c0_46] : memref<9x16x8xbf16, #tpu.memory_space<vmem>>, vector<1x16x8xbf16>
    %60 = vector.shape_cast %59 : vector<1x16x8xbf16> to vector<16x8xbf16>
    %cst_47 = arith.constant dense<0.000000e+00> : vector<16x128xf32>
    %61 = tpu.matmul %60, %58, %cst_47 {dimension_numbers = #tpu.dot_dimension_numbers<[1], [0], [0], [1], [0, 0, 1, 1], [], []>} : vector<16x8xbf16>, vector<8x128xbf16>, vector<16x128xf32> -> vector<16x128xf32>
    %62 = vector.broadcast %57 : vector<16x1xf32> to vector<16x128xf32>
    %63 = arith.addf %62, %61 : vector<16x128xf32>
    %c0_48 = arith.constant 0 : index
    %c128_49 = arith.constant 128 : index
    %64 = vector.load %arg13[%c0_48, %c128_49] : memref<8x384xbf16, #tpu.memory_space<vmem>>, vector<8x128xbf16>
    %c4 = arith.constant 4 : index
    %c0_50 = arith.constant 0 : index
    %c0_51 = arith.constant 0 : index
    %65 = vector.load %arg5[%c4, %c0_50, %c0_51] : memref<9x16x8xbf16, #tpu.memory_space<vmem>>, vector<1x16x8xbf16>
    %66 = vector.shape_cast %65 : vector<1x16x8xbf16> to vector<16x8xbf16>
    %cst_52 = arith.constant dense<0.000000e+00> : vector<16x128xf32>
    %67 = tpu.matmul %66, %64, %cst_52 {dimension_numbers = #tpu.dot_dimension_numbers<[1], [0], [0], [1], [0, 0, 1, 1], [], []>} : vector<16x8xbf16>, vector<8x128xbf16>, vector<16x128xf32> -> vector<16x128xf32>
    %68 = arith.addf %63, %67 : vector<16x128xf32>
    %c0_53 = arith.constant 0 : index
    %c130 = arith.constant 130 : index
    %69 = vector.load %arg13[%c0_53, %c130] : memref<8x384xbf16, #tpu.memory_space<vmem>>, vector<8x128xbf16>
    %c5 = arith.constant 5 : index
    %c0_54 = arith.constant 0 : index
    %c0_55 = arith.constant 0 : index
    %70 = vector.load %arg5[%c5, %c0_54, %c0_55] : memref<9x16x8xbf16, #tpu.memory_space<vmem>>, vector<1x16x8xbf16>
    %71 = vector.shape_cast %70 : vector<1x16x8xbf16> to vector<16x8xbf16>
    %cst_56 = arith.constant dense<0.000000e+00> : vector<16x128xf32>
    %72 = tpu.matmul %71, %69, %cst_56 {dimension_numbers = #tpu.dot_dimension_numbers<[1], [0], [0], [1], [0, 0, 1, 1], [], []>} : vector<16x8xbf16>, vector<8x128xbf16>, vector<16x128xf32> -> vector<16x128xf32>
    %73 = arith.addf %68, %72 : vector<16x128xf32>
    %74 = vector.extract_strided_slice %73 {offsets = [0, 0], sizes = [8, 128], strides = [1, 1]} : vector<16x128xf32> to vector<8x128xf32>
    %75 = vector.extract_strided_slice %73 {offsets = [8, 0], sizes = [8, 128], strides = [1, 1]} : vector<16x128xf32> to vector<8x128xf32>
    %76 = arith.negf %75 : vector<8x128xf32>
    %77 = math.exp %76 : vector<8x128xf32>
    %cst_57 = arith.constant 1.000000e+00 : f32
    %78 = vector.broadcast %cst_57 : f32 to vector<8x128xf32>
    %79 = arith.addf %78, %77 : vector<8x128xf32>
    %80 = arith.divf %78, %79 : vector<8x128xf32>
    %81 = arith.mulf %74, %80 : vector<8x128xf32>
    %c1_58 = arith.constant 1 : index
    %c0_59 = arith.constant 0 : index
    %c0_60 = arith.constant 0 : index
    %82 = vector.load %arg7[%c1_58, %c0_59, %c0_60] : memref<3x8x8xbf16, #tpu.memory_space<vmem>>, vector<1x8x8xbf16>
    %83 = vector.shape_cast %82 : vector<1x8x8xbf16> to vector<8x8xbf16>
    %84 = arith.truncf %81 : vector<8x128xf32> to vector<8x128xbf16>
    %cst_61 = arith.constant dense<0.000000e+00> : vector<8x128xf32>
    %85 = tpu.matmul %83, %84, %cst_61 {dimension_numbers = #tpu.dot_dimension_numbers<[1], [0], [0], [1], [0, 0, 1, 1], [], []>} : vector<8x8xbf16>, vector<8x128xbf16>, vector<8x128xf32> -> vector<8x128xf32>
    %c1_62 = arith.constant 1 : index
    %c0_63 = arith.constant 0 : index
    %c0_64 = arith.constant 0 : index
    %86 = vector.load %arg8[%c1_62, %c0_63, %c0_64] : memref<3x8x1xf32, #tpu.memory_space<vmem>>, vector<1x8x1xf32>
    %87 = vector.shape_cast %86 : vector<1x8x1xf32> to vector<8x1xf32>
    %88 = vector.broadcast %87 : vector<8x1xf32> to vector<8x128xf32>
    %89 = arith.addf %85, %88 : vector<8x128xf32>
    %cst_65 = arith.constant 0.000000e+00 : f32
    %90 = vector.broadcast %cst_65 : f32 to vector<8x128xf32>
    %91 = arith.maximumf %89, %90 : vector<8x128xf32>
    %92 = arith.addf %53, %91 : vector<8x128xf32>
    %93 = vector.broadcast %1 : vector<1x128xf32> to vector<8x128xf32>
    %94 = arith.mulf %92, %93 : vector<8x128xf32>
    %95 = arith.truncf %94 : vector<8x128xf32> to vector<8x128xbf16>
    %c0_66 = arith.constant 0 : index
    %c128_67 = arith.constant 128 : index
    %96 = vector.load %arg13[%c0_66, %c128_67] : memref<8x384xbf16, #tpu.memory_space<vmem>>, vector<8x128xbf16>
    tpu.vector_store %arg13[%c0_66, %c128_67], %95 {strides = array<i32>} : memref<8x384xbf16, #tpu.memory_space<vmem>>, vector<8x128xbf16>,
    %c2_68 = arith.constant 2 : index
    %c0_69 = arith.constant 0 : index
    %c0_70 = arith.constant 0 : index
    %97 = vector.load %arg6[%c2_68, %c0_69, %c0_70] : memref<3x16x1xf32, #tpu.memory_space<vmem>>, vector<1x16x1xf32>
    %98 = vector.shape_cast %97 : vector<1x16x1xf32> to vector<16x1xf32>
    %c0_71 = arith.constant 0 : index
    %c124 = arith.constant 124 : index
    %99 = vector.load %arg13[%c0_71, %c124] : memref<8x384xbf16, #tpu.memory_space<vmem>>, vector<8x128xbf16>
    %c6 = arith.constant 6 : index
    %c0_72 = arith.constant 0 : index
    %c0_73 = arith.constant 0 : index
    %100 = vector.load %arg5[%c6, %c0_72, %c0_73] : memref<9x16x8xbf16, #tpu.memory_space<vmem>>, vector<1x16x8xbf16>
    %101 = vector.shape_cast %100 : vector<1x16x8xbf16> to vector<16x8xbf16>
    %cst_74 = arith.constant dense<0.000000e+00> : vector<16x128xf32>
    %102 = tpu.matmul %101, %99, %cst_74 {dimension_numbers = #tpu.dot_dimension_numbers<[1], [0], [0], [1], [0, 0, 1, 1], [], []>} : vector<16x8xbf16>, vector<8x128xbf16>, vector<16x128xf32> -> vector<16x128xf32>
    %103 = vector.broadcast %98 : vector<16x1xf32> to vector<16x128xf32>
    %104 = arith.addf %103, %102 : vector<16x128xf32>
    %c0_75 = arith.constant 0 : index
    %c128_76 = arith.constant 128 : index
    %105 = vector.load %arg13[%c0_75, %c128_76] : memref<8x384xbf16, #tpu.memory_space<vmem>>, vector<8x128xbf16>
    %c7 = arith.constant 7 : index
    %c0_77 = arith.constant 0 : index
    %c0_78 = arith.constant 0 : index
    %106 = vector.load %arg5[%c7, %c0_77, %c0_78] : memref<9x16x8xbf16, #tpu.memory_space<vmem>>, vector<1x16x8xbf16>
    %107 = vector.shape_cast %106 : vector<1x16x8xbf16> to vector<16x8xbf16>
    %cst_79 = arith.constant dense<0.000000e+00> : vector<16x128xf32>
    %108 = tpu.matmul %107, %105, %cst_79 {dimension_numbers = #tpu.dot_dimension_numbers<[1], [0], [0], [1], [0, 0, 1, 1], [], []>} : vector<16x8xbf16>, vector<8x128xbf16>, vector<16x128xf32> -> vector<16x128xf32>
    %109 = arith.addf %104, %108 : vector<16x128xf32>
    %c0_80 = arith.constant 0 : index
    %c132 = arith.constant 132 : index
    %110 = vector.load %arg13[%c0_80, %c132] : memref<8x384xbf16, #tpu.memory_space<vmem>>, vector<8x128xbf16>
    %c8 = arith.constant 8 : index
    %c0_81 = arith.constant 0 : index
    %c0_82 = arith.constant 0 : index
    %111 = vector.load %arg5[%c8, %c0_81, %c0_82] : memref<9x16x8xbf16, #tpu.memory_space<vmem>>, vector<1x16x8xbf16>
    %112 = vector.shape_cast %111 : vector<1x16x8xbf16> to vector<16x8xbf16>
    %cst_83 = arith.constant dense<0.000000e+00> : vector<16x128xf32>
    %113 = tpu.matmul %112, %110, %cst_83 {dimension_numbers = #tpu.dot_dimension_numbers<[1], [0], [0], [1], [0, 0, 1, 1], [], []>} : vector<16x8xbf16>, vector<8x128xbf16>, vector<16x128xf32> -> vector<16x128xf32>
    %114 = arith.addf %109, %113 : vector<16x128xf32>
    %115 = vector.extract_strided_slice %114 {offsets = [0, 0], sizes = [8, 128], strides = [1, 1]} : vector<16x128xf32> to vector<8x128xf32>
    %116 = vector.extract_strided_slice %114 {offsets = [8, 0], sizes = [8, 128], strides = [1, 1]} : vector<16x128xf32> to vector<8x128xf32>
    %117 = arith.negf %116 : vector<8x128xf32>
    %118 = math.exp %117 : vector<8x128xf32>
    %cst_84 = arith.constant 1.000000e+00 : f32
    %119 = vector.broadcast %cst_84 : f32 to vector<8x128xf32>
    %120 = arith.addf %119, %118 : vector<8x128xf32>
    %121 = arith.divf %119, %120 : vector<8x128xf32>
    %122 = arith.mulf %115, %121 : vector<8x128xf32>
    %c2_85 = arith.constant 2 : index
    %c0_86 = arith.constant 0 : index
    %c0_87 = arith.constant 0 : index
    %123 = vector.load %arg7[%c2_85, %c0_86, %c0_87] : memref<3x8x8xbf16, #tpu.memory_space<vmem>>, vector<1x8x8xbf16>
    %124 = vector.shape_cast %123 : vector<1x8x8xbf16> to vector<8x8xbf16>
    %125 = arith.truncf %122 : vector<8x128xf32> to vector<8x128xbf16>
    %cst_88 = arith.constant dense<0.000000e+00> : vector<8x128xf32>
    %126 = tpu.matmul %124, %125, %cst_88 {dimension_numbers = #tpu.dot_dimension_numbers<[1], [0], [0], [1], [0, 0, 1, 1], [], []>} : vector<8x8xbf16>, vector<8x128xbf16>, vector<8x128xf32> -> vector<8x128xf32>
    %c2_89 = arith.constant 2 : index
    %c0_90 = arith.constant 0 : index
    %c0_91 = arith.constant 0 : index
    %127 = vector.load %arg8[%c2_89, %c0_90, %c0_91] : memref<3x8x1xf32, #tpu.memory_space<vmem>>, vector<1x8x1xf32>
    %128 = vector.shape_cast %127 : vector<1x8x1xf32> to vector<8x1xf32>
    %129 = vector.broadcast %128 : vector<8x1xf32> to vector<8x128xf32>
    %130 = arith.addf %126, %129 : vector<8x128xf32>
    %cst_92 = arith.constant 0.000000e+00 : f32
    %131 = vector.broadcast %cst_92 : f32 to vector<8x128xf32>
    %132 = arith.maximumf %130, %131 : vector<8x128xf32>
    %133 = arith.addf %94, %132 : vector<8x128xf32>
    %134 = vector.broadcast %1 : vector<1x128xf32> to vector<8x128xf32>
    %135 = arith.mulf %133, %134 : vector<8x128xf32>
    %136 = vector.broadcast %1 : vector<1x128xf32> to vector<8x128xf32>
    %137 = arith.mulf %135, %136 : vector<8x128xf32>
    %c0_93 = arith.constant 0 : index
    %c0_94 = arith.constant 0 : index
    %c0_95 = arith.constant 0 : index
    %138 = vector.load %arg12[%c0_93, %c0_94, %c0_95] : memref<1x8x128xf32, #tpu.memory_space<vmem>>, vector<1x8x128xf32>
    %139 = vector.shape_cast %138 : vector<1x8x128xf32> to vector<8x128xf32>
    %140 = vector.shape_cast %137 : vector<8x128xf32> to vector<1x8x128xf32>
    tpu.vector_store %arg12[%c0_93, %c0_94, %c0_95], %140 {strides = array<i32>} : memref<1x8x128xf32, #tpu.memory_space<vmem>>, vector<1x8x128xf32>,
    %c0_96 = arith.constant 0 : index
    %c0_97 = arith.constant 0 : index
    %141 = vector.load %arg9[%c0_96, %c0_97] : memref<4x8xbf16, #tpu.memory_space<vmem>>, vector<4x8xbf16>
    %142 = arith.truncf %135 : vector<8x128xf32> to vector<8x128xbf16>
    %cst_98 = arith.constant dense<0.000000e+00> : vector<4x128xf32>
    %143 = tpu.matmul %141, %142, %cst_98 {dimension_numbers = #tpu.dot_dimension_numbers<[1], [0], [0], [1], [0, 0, 1, 1], [], []>} : vector<4x8xbf16>, vector<8x128xbf16>, vector<4x128xf32> -> vector<4x128xf32>
    %c0_99 = arith.constant 0 : index
    %c0_100 = arith.constant 0 : index
    %144 = vector.load %arg10[%c0_99, %c0_100] : memref<4x1xf32, #tpu.memory_space<vmem>>, vector<4x1xf32>
    %145 = vector.broadcast %144 : vector<4x1xf32> to vector<4x128xf32>
    %146 = arith.addf %143, %145 : vector<4x128xf32>
    %147 = vector.broadcast %1 : vector<1x128xf32> to vector<4x128xf32>
    %148 = arith.mulf %146, %147 : vector<4x128xf32>
    %c0_101 = arith.constant 0 : index
    %c0_102 = arith.constant 0 : index
    %c0_103 = arith.constant 0 : index
    %149 = vector.load %arg11[%c0_101, %c0_102, %c0_103] : memref<1x4x128xf32, #tpu.memory_space<vmem>>, vector<1x4x128xf32>
    %150 = vector.shape_cast %149 : vector<1x4x128xf32> to vector<4x128xf32>
    %151 = vector.shape_cast %148 : vector<4x128xf32> to vector<1x4x128xf32>
    tpu.vector_store %arg11[%c0_101, %c0_102, %c0_103], %151 {strides = array<i32>} : memref<1x4x128xf32, #tpu.memory_space<vmem>>, vector<1x4x128xf32>,
    return
  }
  func.func @transform_0(%arg0: i32) -> (i32, i32, i32) {
    %c0_i32 = arith.constant 0 : i32
    %c0_i32_0 = arith.constant 0 : i32
    %c0_i32_1 = arith.constant 0 : i32
    return %arg0, %c0_i32, %c0_i32_0 : i32, i32, i32
  }
  func.func @transform_1(%arg0: i32) -> (i32, i32, i32) {
    %c0_i32 = arith.constant 0 : i32
    %c0_i32_0 = arith.constant 0 : i32
    %c0_i32_1 = arith.constant 0 : i32
    return %arg0, %c0_i32, %c0_i32_0 : i32, i32, i32
  }
  func.func @transform_2(%arg0: i32) -> (i32, i32) {
    %c0_i32 = arith.constant 0 : i32
    %c0_i32_0 = arith.constant 0 : i32
    %c0_i32_1 = arith.constant 0 : i32
    return %c0_i32, %c0_i32_0 : i32, i32
  }
  func.func @transform_3(%arg0: i32) -> (i32, i32) {
    %c0_i32 = arith.constant 0 : i32
    %c0_i32_0 = arith.constant 0 : i32
    %c0_i32_1 = arith.constant 0 : i32
    return %c0_i32, %c0_i32_0 : i32, i32
  }
  func.func @transform_4(%arg0: i32) -> (i32, i32, i32) {
    %c0_i32 = arith.constant 0 : i32
    %c0_i32_0 = arith.constant 0 : i32
    %c0_i32_1 = arith.constant 0 : i32
    %c0_i32_2 = arith.constant 0 : i32
    return %c0_i32, %c0_i32_0, %c0_i32_1 : i32, i32, i32
  }
  func.func @transform_5(%arg0: i32) -> (i32, i32, i32) {
    %c0_i32 = arith.constant 0 : i32
    %c0_i32_0 = arith.constant 0 : i32
    %c0_i32_1 = arith.constant 0 : i32
    %c0_i32_2 = arith.constant 0 : i32
    return %c0_i32, %c0_i32_0, %c0_i32_1 : i32, i32, i32
  }
  func.func @transform_6(%arg0: i32) -> (i32, i32, i32) {
    %c0_i32 = arith.constant 0 : i32
    %c0_i32_0 = arith.constant 0 : i32
    %c0_i32_1 = arith.constant 0 : i32
    %c0_i32_2 = arith.constant 0 : i32
    return %c0_i32, %c0_i32_0, %c0_i32_1 : i32, i32, i32
  }
  func.func @transform_7(%arg0: i32) -> (i32, i32, i32) {
    %c0_i32 = arith.constant 0 : i32
    %c0_i32_0 = arith.constant 0 : i32
    %c0_i32_1 = arith.constant 0 : i32
    %c0_i32_2 = arith.constant 0 : i32
    return %c0_i32, %c0_i32_0, %c0_i32_1 : i32, i32, i32
  }
  func.func @transform_8(%arg0: i32) -> (i32, i32) {
    %c0_i32 = arith.constant 0 : i32
    %c0_i32_0 = arith.constant 0 : i32
    %c0_i32_1 = arith.constant 0 : i32
    return %c0_i32, %c0_i32_0 : i32, i32
  }
  func.func @transform_9(%arg0: i32) -> (i32, i32) {
    %c0_i32 = arith.constant 0 : i32
    %c0_i32_0 = arith.constant 0 : i32
    %c0_i32_1 = arith.constant 0 : i32
    return %c0_i32, %c0_i32_0 : i32, i32
  }
  func.func @transform_10(%arg0: i32) -> (i32, i32, i32) {
    %c0_i32 = arith.constant 0 : i32
    %c0_i32_0 = arith.constant 0 : i32
    %c0_i32_1 = arith.constant 0 : i32
    return %arg0, %c0_i32, %c0_i32_0 : i32, i32, i32
  }
  func.func @transform_11(%arg0: i32) -> (i32, i32, i32) {
    %c0_i32 = arith.constant 0 : i32
    %c0_i32_0 = arith.constant 0 : i32
    %c0_i32_1 = arith.constant 0 : i32
    return %arg0, %c0_i32, %c0_i32_0 : i32, i32, i32
  }
}

</mosaic_0001>

<llo_original>
// kernel: tpu_custom_call.1
$region0: #{tpu_custom_call.1}
  #allocation0 [shape = 'u32[]', space=smem, size = 0x4, offset = 0x4, fixed_abs, tag = 'smem constant byte address 0x4 - core index']
  #allocation1 [shape = 'u32[72,128]{1,0:T(1,128)}', space=vmem, size = 0x9000, scoped, tag = 'internal scratch']
  #allocation2 [shape = 'bf16[8,384]{1,0:T(8,128)(2,1)}', space=vmem, size = 0x1800, scoped, tag = 'scratch operand']
  %s0 = inlined_call_operand.vmem [shape: bf16[2,8,128], index: 0, kind: input, shape index: {}]
  %s1 = inlined_call_operand.vmem [shape: f32[2,1,128], index: 1, kind: input, shape index: {}]
  %s2 = inlined_call_operand.vmem [shape: bf16[8,8], index: 2, kind: input, shape index: {}]
  %s3 = inlined_call_operand.vmem [shape: f32[8,1], index: 3, kind: input, shape index: {}]
  %s4 = inlined_call_operand.vmem [shape: bf16[9,16,8], index: 4, kind: input, shape index: {}]
  %s5 = inlined_call_operand.vmem [shape: f32[3,16,1], index: 5, kind: input, shape index: {}]
  %s6 = inlined_call_operand.vmem [shape: bf16[3,8,8], index: 6, kind: input, shape index: {}]
  %s7 = inlined_call_operand.vmem [shape: f32[3,8,1], index: 7, kind: input, shape index: {}]
  %s8 = inlined_call_operand.vmem [shape: bf16[4,8], index: 8, kind: input, shape index: {}]
  %s9 = inlined_call_operand.vmem [shape: f32[4,1], index: 9, kind: input, shape index: {}]
  %s10 = inlined_call_operand.hbm [shape: f32[2,4,128], index: 10, kind: output, shape index: {0}]
  %s11 = inlined_call_operand.hbm [shape: f32[2,8,128], index: 11, kind: output, shape index: {1}]
  %12 = xla_tuple %s10, %s11
  %s13 = sld [smem:[#allocation0]]
  $region81: #{tpu_custom_call.1} parent=0
    _
  %s15 = ssub.s32 1, %s13
  %s16 = scalar_select 0, %s15, %s13
  $region1: #{tpu_custom_call.1} parent=0
    #allocation3 [shape = 'u8[4096]{0}', space=vmem, size = 0x1000, scoped, tag = 'output window, operand 0']
    #allocation4 [shape = 's32[2]{0}', space=sflag, size = 0x8, scoped, tag = 'scoped memory for tpu_custom_call.1']
    #allocation5 [shape = 'u8[8192]{0}', space=vmem, size = 0x2000, scoped, tag = 'output window, operand 1']
    #allocation6 [shape = 's32[2]{0}', space=sflag, size = 0x8, scoped, tag = 'scoped memory for tpu_custom_call.1']
    %17 = vsyncpa [#allocation4], 0
    %s18 = scalar_lea.sflag [#allocation4], 1
    %19 = vsyncpa %s18, 0
    %20 = vsyncpa [#allocation6], 0
    %s21 = scalar_lea.sflag [#allocation6], 1
    %22 = vsyncpa %s21, 0
    loop: start=0, step=1, limit=4
    $region2: #{tpu_custom_call.1} parent=1 // loop_pre_header
      _
    $region3: #{tpu_custom_call.1} parent=1 // loop_header
      %s24 = sphi 0, %s28
      %p25 = scmp.ge.s32.totalorder %s24, 4
      %s34 = sphi 0, %s36
      %s37 = sphi 0, %s34
      %s38 = sphi 0, %s37
      %s54 = sphi 0, %s38
      %s60 = sphi 0, %s62
      %s63 = sphi 0, %s60
      %s64 = sphi 0, %s63
      %s80 = sphi 0, %s64
      %s84 = sphi 0, %s84
      %s86 = sphi 0, %s84
      %s87 = sphi 0, %s86
      %s101 = sphi 0, %s87
      %s105 = sphi 0, %s105
      %s107 = sphi 0, %s105
      %s108 = sphi 0, %s107
      %s122 = sphi 0, %s108
      %s126 = sphi 0, %s126
      %s128 = sphi 0, %s126
      %s129 = sphi 0, %s128
      %s143 = sphi 0, %s129
      %s147 = sphi 0, %s147
      %s149 = sphi 0, %s147
      %s150 = sphi 0, %s149
      %s164 = sphi 0, %s150
      %s168 = sphi 0, %s168
      %s170 = sphi 0, %s168
      %s171 = sphi 0, %s170
      %s185 = sphi 0, %s171
      %s189 = sphi 0, %s189
      %s191 = sphi 0, %s189
      %s192 = sphi 0, %s191
      %s206 = sphi 0, %s192
      %s210 = sphi 0, %s210
      %s212 = sphi 0, %s210
      %s213 = sphi 0, %s212
      %s227 = sphi 0, %s213
      %s231 = sphi 0, %s231
      %s233 = sphi 0, %s231
      %s234 = sphi 0, %s233
      %s248 = sphi 0, %s234
      %s254 = sphi 0, %s256
      %s257 = sphi 0, %s254
      %s258 = sphi 0, %s257
      %s274 = sphi 0, %s258
      %s280 = sphi 0, %s282
      %s283 = sphi 0, %s280
      %s284 = sphi 0, %s283
      %s300 = sphi 0, %s284
    $region4: #{tpu_custom_call.1} parent=1 // loop_header_branch
      %27 = sbr.rel (%p25) target = $region8
    $region5: #{tpu_custom_call.1} parent=1 // loop_body
      %s29 = ssub.s32 %s24, 1
      %s30 = ssub.s32 %s24, 2
      %s31 = sadd.s32 %s24, 1
      %s32 = ssub.s32 %s24, %s31
      %p33 = scmp.eq.s32.totalorder %s32, 0
      %s35 = sadd.s32 %s34, 1
      %s36 = scalar_select %p33, %s34, %s35
      %p39 = pneg %p33
      %p40 = scmp.eq.s32.totalorder %s24, 1
      %p41 = por %p39, %p40
      %p42 = scmp.ne.s32.totalorder %s34, %s37
      %p43 = scmp.eq.s32.totalorder %s24, 0
      %p44 = por %p42, %p43
      %p45 = scmp.ne.s32.totalorder %s34, %s37
      %p46 = scmp.eq.s32.totalorder %s29, 1
      %p47 = por %p45, %p46
      %p48 = scmp.ne.s32.totalorder %s37, %s38
      %p49 = scmp.eq.s32.totalorder %s29, 0
      %p50 = por %p48, %p49
      %p51 = scmp.ne.s32.totalorder %s37, %s38
      %p52 = scmp.eq.s32.totalorder %s30, 1
      %p53 = por %p51, %p52
      %p55 = scmp.ne.s32.totalorder %s38, %s54
      %p56 = scmp.eq.s32.totalorder %s30, 0
      %p57 = por %p55, %p56
      %s58 = ssub.s32 %s24, %s31
      %p59 = scmp.eq.s32.totalorder %s58, 0
      %s61 = sadd.s32 %s60, 1
      %s62 = scalar_select %p59, %s60, %s61
      %p65 = pneg %p59
      %p66 = scmp.eq.s32.totalorder %s24, 1
      %p67 = por %p65, %p66
      %p68 = scmp.ne.s32.totalorder %s60, %s63
      %p69 = scmp.eq.s32.totalorder %s24, 0
      %p70 = por %p68, %p69
      %p71 = scmp.ne.s32.totalorder %s60, %s63
      %p72 = scmp.eq.s32.totalorder %s29, 1
      %p73 = por %p71, %p72
      %p74 = scmp.ne.s32.totalorder %s63, %s64
      %p75 = scmp.eq.s32.totalorder %s29, 0
      %p76 = por %p74, %p75
      %p77 = scmp.ne.s32.totalorder %s63, %s64
      %p78 = scmp.eq.s32.totalorder %s30, 1
      %p79 = por %p77, %p78
      %p81 = scmp.ne.s32.totalorder %s64, %s80
      %p82 = scmp.eq.s32.totalorder %s30, 0
      %p83 = por %p81, %p82
      %s85 = sadd.s32 %s84, 1
      %p88 = scmp.eq.s32.totalorder %s24, 1
      %p89 = scmp.ne.s32.totalorder %s84, %s86
      %p90 = scmp.eq.s32.totalorder %s24, 0
      %p91 = por %p89, %p90
      %p92 = scmp.ne.s32.totalorder %s84, %s86
      %p93 = scmp.eq.s32.totalorder %s29, 1
      %p94 = por %p92, %p93
      %p95 = scmp.ne.s32.totalorder %s86, %s87
      %p96 = scmp.eq.s32.totalorder %s29, 0
      %p97 = por %p95, %p96
      %p98 = scmp.ne.s32.totalorder %s86, %s87
      %p99 = scmp.eq.s32.totalorder %s30, 1
      %p100 = por %p98, %p99
      %p102 = scmp.ne.s32.totalorder %s87, %s101
      %p103 = scmp.eq.s32.totalorder %s30, 0
      %p104 = por %p102, %p103
      %s106 = sadd.s32 %s105, 1
      %p109 = scmp.eq.s32.totalorder %s24, 1
      %p110 = scmp.ne.s32.totalorder %s105, %s107
      %p111 = scmp.eq.s32.totalorder %s24, 0
      %p112 = por %p110, %p111
      %p113 = scmp.ne.s32.totalorder %s105, %s107
      %p114 = scmp.eq.s32.totalorder %s29, 1
      %p115 = por %p113, %p114
      %p116 = scmp.ne.s32.totalorder %s107, %s108
      %p117 = scmp.eq.s32.totalorder %s29, 0
      %p118 = por %p116, %p117
      %p119 = scmp.ne.s32.totalorder %s107, %s108
      %p120 = scmp.eq.s32.totalorder %s30, 1
      %p121 = por %p119, %p120
      %p123 = scmp.ne.s32.totalorder %s108, %s122
      %p124 = scmp.eq.s32.totalorder %s30, 0
      %p125 = por %p123, %p124
      %s127 = sadd.s32 %s126, 1
      %p130 = scmp.eq.s32.totalorder %s24, 1
      %p131 = scmp.ne.s32.totalorder %s126, %s128
      %p132 = scmp.eq.s32.totalorder %s24, 0
      %p133 = por %p131, %p132
      %p134 = scmp.ne.s32.totalorder %s126, %s128
      %p135 = scmp.eq.s32.totalorder %s29, 1
      %p136 = por %p134, %p135
      %p137 = scmp.ne.s32.totalorder %s128, %s129
      %p138 = scmp.eq.s32.totalorder %s29, 0
      %p139 = por %p137, %p138
      %p140 = scmp.ne.s32.totalorder %s128, %s129
      %p141 = scmp.eq.s32.totalorder %s30, 1
      %p142 = por %p140, %p141
      %p144 = scmp.ne.s32.totalorder %s129, %s143
      %p145 = scmp.eq.s32.totalorder %s30, 0
      %p146 = por %p144, %p145
      %s148 = sadd.s32 %s147, 1
      %p151 = scmp.eq.s32.totalorder %s24, 1
      %p152 = scmp.ne.s32.totalorder %s147, %s149
      %p153 = scmp.eq.s32.totalorder %s24, 0
      %p154 = por %p152, %p153
      %p155 = scmp.ne.s32.totalorder %s147, %s149
      %p156 = scmp.eq.s32.totalorder %s29, 1
      %p157 = por %p155, %p156
      %p158 = scmp.ne.s32.totalorder %s149, %s150
      %p159 = scmp.eq.s32.totalorder %s29, 0
      %p160 = por %p158, %p159
      %p161 = scmp.ne.s32.totalorder %s149, %s150
      %p162 = scmp.eq.s32.totalorder %s30, 1
      %p163 = por %p161, %p162
      %p165 = scmp.ne.s32.totalorder %s150, %s164
      %p166 = scmp.eq.s32.totalorder %s30, 0
      %p167 = por %p165, %p166
      %s169 = sadd.s32 %s168, 1
      %p172 = scmp.eq.s32.totalorder %s24, 1
      %p173 = scmp.ne.s32.totalorder %s168, %s170
      %p174 = scmp.eq.s32.totalorder %s24, 0
      %p175 = por %p173, %p174
      %p176 = scmp.ne.s32.totalorder %s168, %s170
      %p177 = scmp.eq.s32.totalorder %s29, 1
      %p178 = por %p176, %p177
      %p179 = scmp.ne.s32.totalorder %s170, %s171
      %p180 = scmp.eq.s32.totalorder %s29, 0
      %p181 = por %p179, %p180
      %p182 = scmp.ne.s32.totalorder %s170, %s171
      %p183 = scmp.eq.s32.totalorder %s30, 1
      %p184 = por %p182, %p183
      %p186 = scmp.ne.s32.totalorder %s171, %s185
      %p187 = scmp.eq.s32.totalorder %s30, 0
      %p188 = por %p186, %p187
      %s190 = sadd.s32 %s189, 1
      %p193 = scmp.eq.s32.totalorder %s24, 1
      %p194 = scmp.ne.s32.totalorder %s189, %s191
      %p195 = scmp.eq.s32.totalorder %s24, 0
      %p196 = por %p194, %p195
      %p197 = scmp.ne.s32.totalorder %s189, %s191
      %p198 = scmp.eq.s32.totalorder %s29, 1
      %p199 = por %p197, %p198
      %p200 = scmp.ne.s32.totalorder %s191, %s192
      %p201 = scmp.eq.s32.totalorder %s29, 0
      %p202 = por %p200, %p201
      %p203 = scmp.ne.s32.totalorder %s191, %s192
      %p204 = scmp.eq.s32.totalorder %s30, 1
      %p205 = por %p203, %p204
      %p207 = scmp.ne.s32.totalorder %s192, %s206
      %p208 = scmp.eq.s32.totalorder %s30, 0
      %p209 = por %p207, %p208
      %s211 = sadd.s32 %s210, 1
      %p214 = scmp.eq.s32.totalorder %s24, 1
      %p215 = scmp.ne.s32.totalorder %s210, %s212
      %p216 = scmp.eq.s32.totalorder %s24, 0
      %p217 = por %p215, %p216
      %p218 = scmp.ne.s32.totalorder %s210, %s212
      %p219 = scmp.eq.s32.totalorder %s29, 1
      %p220 = por %p218, %p219
      %p221 = scmp.ne.s32.totalorder %s212, %s213
      %p222 = scmp.eq.s32.totalorder %s29, 0
      %p223 = por %p221, %p222
      %p224 = scmp.ne.s32.totalorder %s212, %s213
      %p225 = scmp.eq.s32.totalorder %s30, 1
      %p226 = por %p224, %p225
      %p228 = scmp.ne.s32.totalorder %s213, %s227
      %p229 = scmp.eq.s32.totalorder %s30, 0
      %p230 = por %p228, %p229
      %s232 = sadd.s32 %s231, 1
      %p235 = scmp.eq.s32.totalorder %s24, 1
      %p236 = scmp.ne.s32.totalorder %s231, %s233
      %p237 = scmp.eq.s32.totalorder %s24, 0
      %p238 = por %p236, %p237
      %p239 = scmp.ne.s32.totalorder %s231, %s233
      %p240 = scmp.eq.s32.totalorder %s29, 1
      %p241 = por %p239, %p240
      %p242 = scmp.ne.s32.totalorder %s233, %s234
      %p243 = scmp.eq.s32.totalorder %s29, 0
      %p244 = por %p242, %p243
      %p245 = scmp.ne.s32.totalorder %s233, %s234
      %p246 = scmp.eq.s32.totalorder %s30, 1
      %p247 = por %p245, %p246
      %p249 = scmp.ne.s32.totalorder %s234, %s248
      %p250 = scmp.eq.s32.totalorder %s30, 0
      %p251 = por %p249, %p250
      %s252 = ssub.s32 %s24, %s31
      %p253 = scmp.eq.s32.totalorder %s252, 0
      %s255 = sadd.s32 %s254, 1
      %s256 = scalar_select %p253, %s254, %s255
      %p259 = pneg %p253
      %p260 = scmp.eq.s32.totalorder %s24, 1
      %p261 = por %p259, %p260
      %p262 = scmp.ne.s32.totalorder %s254, %s257
      %p263 = scmp.eq.s32.totalorder %s24, 0
      %p264 = por %p262, %p263
      %p265 = scmp.ne.s32.totalorder %s254, %s257
      %p266 = scmp.eq.s32.totalorder %s29, 1
      %p267 = por %p265, %p266
      %p268 = scmp.ne.s32.totalorder %s257, %s258
      %p269 = scmp.eq.s32.totalorder %s29, 0
      %p270 = por %p268, %p269
      %p271 = scmp.ne.s32.totalorder %s257, %s258
      %p272 = scmp.eq.s32.totalorder %s30, 1
      %p273 = por %p271, %p272
      %p275 = scmp.ne.s32.totalorder %s258, %s274
      %p276 = scmp.eq.s32.totalorder %s30, 0
      %p277 = por %p275, %p276
      %s278 = ssub.s32 %s24, %s31
      %p279 = scmp.eq.s32.totalorder %s278, 0
      %s281 = sadd.s32 %s280, 1
      %s282 = scalar_select %p279, %s280, %s281
      %p285 = pneg %p279
      %p286 = scmp.eq.s32.totalorder %s24, 1
      %p287 = por %p285, %p286
      %p288 = scmp.ne.s32.totalorder %s280, %s283
      %p289 = scmp.eq.s32.totalorder %s24, 0
      %p290 = por %p288, %p289
      %p291 = scmp.ne.s32.totalorder %s280, %s283
      %p292 = scmp.eq.s32.totalorder %s29, 1
      %p293 = por %p291, %p292
      %p294 = scmp.ne.s32.totalorder %s283, %s284
      %p295 = scmp.eq.s32.totalorder %s29, 0
      %p296 = por %p294, %p295
      %p297 = scmp.ne.s32.totalorder %s283, %s284
      %p298 = scmp.eq.s32.totalorder %s30, 1
      %p299 = por %p297, %p298
      %p301 = scmp.ne.s32.totalorder %s284, %s300
      %p302 = scmp.eq.s32.totalorder %s30, 0
      %p303 = por %p301, %p302
      %p304 = scmp.le.s32.totalorder 1, %s24
      %p305 = scmp.lt.s32.totalorder %s24, 3
      %p306 = pnand %p304, %p305
      %p307 = pneg %p306
      // Predicated region
      $region9: #{tpu_custom_call.1} parent=5 // pred_check
        _
      $region10: #{tpu_custom_call.1} parent=5 // pred_check_branch
        %309 = sbr.rel (%p306) target = $region12
      $region11: #{tpu_custom_call.1} parent=5 // pred_region
        %s310 = ssub.s32 %s24, 1
        // Predicated region
        $region13: #{tpu_custom_call.1} parent=11 // pred_check
          %p311 = pneg %p97
        $region14: #{tpu_custom_call.1} parent=11 // pred_check_branch
          %313 = sbr.rel (%p311) target = $region16
        $region15: #{tpu_custom_call.1} parent=11 // pred_region
          _
        $region16: #{tpu_custom_call.1} parent=11 // pred_fallthru
          _
        // Predicated region
        $region17: #{tpu_custom_call.1} parent=11 // pred_check
          %p314 = pneg %p118
        $region18: #{tpu_custom_call.1} parent=11 // pred_check_branch
          %316 = sbr.rel (%p314) target = $region20
        $region19: #{tpu_custom_call.1} parent=11 // pred_region
          _
        $region20: #{tpu_custom_call.1} parent=11 // pred_fallthru
          _
        // Predicated region
        $region21: #{tpu_custom_call.1} parent=11 // pred_check
          %p317 = pneg %p139
        $region22: #{tpu_custom_call.1} parent=11 // pred_check_branch
          %319 = sbr.rel (%p317) target = $region24
        $region23: #{tpu_custom_call.1} parent=11 // pred_region
          _
        $region24: #{tpu_custom_call.1} parent=11 // pred_fallthru
          _
        // Predicated region
        $region25: #{tpu_custom_call.1} parent=11 // pred_check
          %p320 = pneg %p160
        $region26: #{tpu_custom_call.1} parent=11 // pred_check_branch
          %322 = sbr.rel (%p320) target = $region28
        $region27: #{tpu_custom_call.1} parent=11 // pred_region
          _
        $region28: #{tpu_custom_call.1} parent=11 // pred_fallthru
          _
        // Predicated region
        $region29: #{tpu_custom_call.1} parent=11 // pred_check
          %p323 = pneg %p181
        $region30: #{tpu_custom_call.1} parent=11 // pred_check_branch
          %325 = sbr.rel (%p323) target = $region32
        $region31: #{tpu_custom_call.1} parent=11 // pred_region
          _
        $region32: #{tpu_custom_call.1} parent=11 // pred_fallthru
          _
        // Predicated region
        $region33: #{tpu_custom_call.1} parent=11 // pred_check
          %p326 = pneg %p202
        $region34: #{tpu_custom_call.1} parent=11 // pred_check_branch
          %328 = sbr.rel (%p326) target = $region36
        $region35: #{tpu_custom_call.1} parent=11 // pred_region
          _
        $region36: #{tpu_custom_call.1} parent=11 // pred_fallthru
          _
        // Predicated region
        $region37: #{tpu_custom_call.1} parent=11 // pred_check
          %p329 = pneg %p223
        $region38: #{tpu_custom_call.1} parent=11 // pred_check_branch
          %331 = sbr.rel (%p329) target = $region40
        $region39: #{tpu_custom_call.1} parent=11 // pred_region
          _
        $region40: #{tpu_custom_call.1} parent=11 // pred_fallthru
          _
        // Predicated region
        $region41: #{tpu_custom_call.1} parent=11 // pred_check
          %p332 = pneg %p244
        $region42: #{tpu_custom_call.1} parent=11 // pred_check_branch
          %334 = sbr.rel (%p332) target = $region44
        $region43: #{tpu_custom_call.1} parent=11 // pred_region
          _
        $region44: #{tpu_custom_call.1} parent=11 // pred_fallthru
          _
      $region12: #{tpu_custom_call.1} parent=5 // pred_fallthru
        _
      %p335 = scmp.lt.s32.totalorder %s24, 2
      // Predicated region
      $region45: #{tpu_custom_call.1} parent=5 // pred_check
        %p336 = pneg %p335
      $region46: #{tpu_custom_call.1} parent=5 // pred_check_branch
        %338 = sbr.rel (%p336) target = $region48
      $region47: #{tpu_custom_call.1} parent=5 // pred_region
        // Predicated region
        $region49: #{tpu_custom_call.1} parent=47 // pred_check
          %p339 = pneg %p44
        $region50: #{tpu_custom_call.1} parent=47 // pred_check_branch
          %341 = sbr.rel (%p339) target = $region52
        $region51: #{tpu_custom_call.1} parent=47 // pred_region
          %p342 = scmp.lt.s32.totalorder %s24, 1
          %s343 = scalar_select %p342, %s24, 1
          %s344 = smul.addr %s343, 4
          %s345 = scalar_lea.vmem %s0, %s344
        $region52: #{tpu_custom_call.1} parent=47 // pred_fallthru
          _
        // Predicated region
        $region53: #{tpu_custom_call.1} parent=47 // pred_check
          %p346 = pneg %p70
        $region54: #{tpu_custom_call.1} parent=47 // pred_check_branch
          %348 = sbr.rel (%p346) target = $region56
        $region55: #{tpu_custom_call.1} parent=47 // pred_region
          %p349 = scmp.lt.s32.totalorder %s24, 1
          %s350 = scalar_select %p349, %s24, 1
          %s351 = scalar_lea.vmem %s1, %s350
        $region56: #{tpu_custom_call.1} parent=47 // pred_fallthru
          _
      $region48: #{tpu_custom_call.1} parent=5 // pred_fallthru
        _
      %p352 = scmp.le.s32.totalorder 1, %s24
      %p353 = scmp.lt.s32.totalorder %s24, 3
      %p354 = pnand %p352, %p353
      %p355 = pneg %p354
      // Predicated region
      $region57: #{tpu_custom_call.1} parent=5 // pred_check
        _
      $region58: #{tpu_custom_call.1} parent=5 // pred_check_branch
        %357 = sbr.rel (%p354) target = $region60
      $region59: #{tpu_custom_call.1} parent=5 // pred_region
        %s358 = ssub.s32 %s24, 1
        %p359 = scmp.lt.s32.totalorder %s29, 1
        %s360 = scalar_select %p359, %s29, 1
        %s361 = smul.addr %s360, 4
        %s362 = scalar_lea.vmem %s0, %s361
        %p363 = pneg %p50
        %p364 = pneg %p47
        %p365 = scmp.lt.s32.totalorder %s29, 1
        %s366 = scalar_select %p365, %s29, 1
        %s367 = scalar_lea.vmem %s1, %s366
        %p368 = pneg %p76
        %p369 = pneg %p73
        %p370 = pneg %p97
        %p371 = pneg %p94
        %p372 = pneg %p118
        %p373 = pneg %p115
        %p374 = pneg %p139
        %p375 = pneg %p136
        %p376 = pneg %p160
        %p377 = pneg %p157
        %p378 = pneg %p181
        %p379 = pneg %p178
        %p380 = pneg %p202
        %p381 = pneg %p199
        %p382 = pneg %p223
        %p383 = pneg %p220
        %p384 = pneg %p244
        %p385 = pneg %p241
        %p386 = pneg %p270
        %p387 = pneg %p267
        %s388 = sand.u32 %s257, 1
        %s389 = scalar_lea.sflag [#allocation4], %s388
        %s390 = sand.u32 %s257, 1
        %s391 = smul.addr %s390, 4
        %s392 = scalar_lea.vmem [#allocation3], %s391
        %p393 = pneg %p296
        %p394 = pneg %p293
        %s395 = sand.u32 %s283, 1
        %s396 = scalar_lea.sflag [#allocation6], %s395
        %s397 = sand.u32 %s283, 1
        %s398 = smul.addr %s397, 8
        %s399 = scalar_lea.vmem [#allocation5], %s398
        %p400 = scmp.lt.s32.totalorder %s29, 1
        %s401 = scalar_select %p400, %s29, 1
        %s402 = smul.addr %s401, 4
        %s403 = scalar_lea.vmem %s0, %s402
        %p404 = scmp.lt.s32.totalorder %s29, 1
        %s405 = scalar_select %p404, %s29, 1
        %s406 = scalar_lea.vmem %s1, %s405
        %v408 = vld [vmem:[%s406] sm:$0x1]
        %v409 = vld [vmem:[%s2] sm:$0xf]
        %v410 = vld [vmem:[%s403] sm:$0xf]
        %v411 = vld [vmem:[%s3] sm:$0xff]
        %413 = vset.pattern.permute.xlu0 0
        %414 = vperm.xlu0 %413, %v411
        %v415 = vpop.permute.xlu0 %414
        %vm417 = vcmask 64512
        %v419 = vsel %vm417, %v409, 0
        %vm421 = vcmask 1043456
        %v423 = vsel %vm421, %v410, 0
        %425 = vmatpush.bf16.msra.mxu0 0
        %426 = vmatpush.bf16.msra.mxu0 0
        %427 = vmatpush.bf16.msra.mxu0 0
        %428 = vmatpush.bf16.msra.mxu0 0
        %429 = vmatpush.bf16.msra.mxu0 0
        %430 = vmatpush.bf16.msra.mxu0 0
        %431 = vmatpush.bf16.msra.mxu0 0
        %432 = vmatpush.bf16.msra.mxu0 %v423
        %433 = vmatmul.bf16.gmra.mxu0 %v419
        %v434 = vpop.f32.mrf.mxu0
        %v435 = vadd.f32 %v415, %v434
        %v436 = vpop.f32.mrf.mxu0
        %437 = vdwg.mxu0
        %v439 = vperm.slane %v408, 0
        %v441 = vmul.f32 %v435, %v439
        %442 = vst [vmem:[#allocation2] sm:$0xff] 0
        %443 = vst [vmem:[#allocation2 + $0x8] sm:$0xf] 0
        %v444 = vpack.c.bf16 %v441, %v441
        %445 = vst [vmem:[#allocation2 + $0x4] sm:$0xf] %v444
        %v446 = vld [vmem:[%s5] sm:$0xff]
        %v447 = vld [vmem:[%s5 + $0x8] sm:$0xff]
        %v448 = vld [vmem:[#allocation2] sm:$0xff]
        %v449 = vld [vmem:[%s4] sm:$0xf]
        %v450 = vld [vmem:[%s4 + $0x4] sm:$0xf]
        %v453 = vunpack.c.l.b16 %v449
        %v454 = vunpack.c.l.b16 %v450
        %v455 = vpack.c.b16 %v454, %v453
        %v457 = vunpack.c.l.b16 %v448
        %v458 = vunpack.c.h.b16 %v448
        %v459 = vpack.c.b16 %v457, %v457
        %v460 = vpack.c.b16 %v458, %v458
        %461 = vrot.lane.b32.xlu0 %v459, 1
        %v462 = vpop.permute.xlu0 %461
        %463 = vrot.lane.b32.xlu0 %v460, 1
        %v464 = vpop.permute.xlu0 %463
        %vm465 = vcmask 7168
        %v466 = vsel %vm465, %v462, %v464
        %v468 = vsel %vm417, %v455, 0
        %v471 = vsel %vm421, %v466, 0
        %473 = vmatpush.bf16.msra.mxu0 0
        %474 = vmatpush.bf16.msra.mxu0 0
        %475 = vmatpush.bf16.msra.mxu0 0
        %476 = vmatpush.bf16.msra.mxu0 0
        %477 = vmatpush.bf16.msra.mxu0 0
        %478 = vmatpush.bf16.msra.mxu0 0
        %479 = vmatpush.bf16.msra.mxu0 0
        %480 = vmatpush.bf16.msra.mxu0 %v471
        %481 = vmatmul.bf16.gmra.mxu0 %v468
        %v482 = vpop.f32.mrf.mxu0
        %v483 = vadd.f32 0.0, %v482
        %v484 = vpop.f32.mrf.mxu0
        %v485 = vadd.f32 0.0, %v484
        %486 = vdwg.mxu0
        %488 = vset.pattern.permute.xlu0 0
        %489 = vperm.xlu0 %488, %v446
        %v490 = vpop.permute.xlu0 %489
        %493 = vset.pattern.permute.xlu0 0
        %494 = vperm.xlu0 %493, %v447
        %v495 = vpop.permute.xlu0 %494
        %v497 = vadd.f32 %v490, %v483
        %v498 = vadd.f32 %v495, %v485
        %v499 = vld [vmem:[#allocation2 + $0x4] sm:$0xf]
        %s500 = scalar_lea.vmem %s4, 8
        %v501 = vld [vmem:[%s500] sm:$0xf]
        %v502 = vld [vmem:[%s500 + $0x4] sm:$0xf]
        %v505 = vunpack.c.l.b16 %v501
        %v506 = vunpack.c.l.b16 %v502
        %v507 = vpack.c.b16 %v506, %v505
        %v509 = vsel %vm417, %v507, 0
        %v512 = vsel %vm421, %v499, 0
        %514 = vmatpush.bf16.msra.mxu0 0
        %515 = vmatpush.bf16.msra.mxu0 0
        %516 = vmatpush.bf16.msra.mxu0 0
        %517 = vmatpush.bf16.msra.mxu0 0
        %518 = vmatpush.bf16.msra.mxu0 0
        %519 = vmatpush.bf16.msra.mxu0 0
        %520 = vmatpush.bf16.msra.mxu0 0
        %521 = vmatpush.bf16.msra.mxu0 %v512
        %522 = vmatmul.bf16.gmra.mxu0 %v509
        %v523 = vpop.f32.mrf.mxu0
        %v524 = vadd.f32 0.0, %v523
        %v525 = vpop.f32.mrf.mxu0
        %v526 = vadd.f32 0.0, %v525
        %527 = vdwg.mxu0
        %v528 = vadd.f32 %v497, %v524
        %v529 = vadd.f32 %v498, %v526
        %v530 = vld [vmem:[#allocation2 + $0x4] sm:$0xff]
        %s531 = scalar_lea.vmem %s4, 16
        %v532 = vld [vmem:[%s531] sm:$0xf]
        %v533 = vld [vmem:[%s531 + $0x4] sm:$0xf]
        %v536 = vunpack.c.l.b16 %v532
        %v537 = vunpack.c.l.b16 %v533
        %v538 = vpack.c.b16 %v537, %v536
        %v540 = vunpack.c.l.b16 %v530
        %v541 = vunpack.c.h.b16 %v530
        %v542 = vpack.c.b16 %v540, %v540
        %v543 = vpack.c.b16 %v541, %v541
        %544 = vrot.lane.b32.xlu0 %v542, 127
        %v545 = vpop.permute.xlu0 %544
        %546 = vrot.lane.b32.xlu0 %v543, 127
        %v547 = vpop.permute.xlu0 %546
        %vm548 = vcmask 1039360
        %v549 = vsel %vm548, %v545, %v547
        %v551 = vsel %vm417, %v538, 0
        %v554 = vsel %vm421, %v549, 0
        %556 = vmatpush.bf16.msra.mxu0 0
        %557 = vmatpush.bf16.msra.mxu0 0
        %558 = vmatpush.bf16.msra.mxu0 0
        %559 = vmatpush.bf16.msra.mxu0 0
        %560 = vmatpush.bf16.msra.mxu0 0
        %561 = vmatpush.bf16.msra.mxu0 0
        %562 = vmatpush.bf16.msra.mxu0 0
        %563 = vmatpush.bf16.msra.mxu0 %v554
        %564 = vmatmul.bf16.gmra.mxu0 %v551
        %v565 = vpop.f32.mrf.mxu0
        %v566 = vadd.f32 0.0, %v565
        %v567 = vpop.f32.mrf.mxu0
        %v568 = vadd.f32 0.0, %v567
        %569 = vdwg.mxu0
        %v570 = vadd.f32 %v528, %v566
        %v571 = vadd.f32 %v529, %v568
        %v572 = vxor.u32 %v571, 2147483648
        %v573 = vmul.f32 %v572, 1.442695
        %v574 = vpow.pop %v573
        %v575 = vadd.f32 %v574, 1.0
        %v576 = vrcp.pop %v575
        %v577 = vmul.f32 %v575, %v576
        %v578 = vsub.f32 1.0, %v577
        %v579 = vmul.f32 %v576, %v578
        %v580 = vadd.f32 %v576, %v579
        %vm581 = vweird.f32 %v575
        %vm582 = vweird.f32 %v576
        %vm583 = vmor %vm581, %vm582
        %v584 = vsel %vm583, %v576, %v580
        %v585 = vand.u32 2147483647, %v575
        %vm586 = vcmp.eq.f32.partialorder %v585, 8.507059e+37
        %v587 = vand.u32 %v575, 2147483648
        %v588 = vor.u32 1.1754944e-38, %v587
        %v589 = vsel %vm586, %v588, %v584
        %v590 = vmul.f32 1.0, %v589
        %v591 = vmul.f32 %v570, %v590
        %v592 = vld [vmem:[%s6] sm:$0xf]
        %v593 = vpack.c.bf16 %v591, %v591
        %v594 = vld [vmem:[%s7] sm:$0xff]
        %596 = vset.pattern.permute.xlu0 0
        %597 = vperm.xlu0 %596, %v594
        %v598 = vpop.permute.xlu0 %597
        %v601 = vsel %vm417, %v592, 0
        %v604 = vsel %vm421, %v593, 0
        %606 = vmatpush.bf16.msra.mxu0 0
        %607 = vmatpush.bf16.msra.mxu0 0
        %608 = vmatpush.bf16.msra.mxu0 0
        %609 = vmatpush.bf16.msra.mxu0 0
        %610 = vmatpush.bf16.msra.mxu0 0
        %611 = vmatpush.bf16.msra.mxu0 0
        %612 = vmatpush.bf16.msra.mxu0 0
        %613 = vmatpush.bf16.msra.mxu0 %v604
        %614 = vmatmul.bf16.gmra.mxu0 %v601
        %v615 = vpop.f32.mrf.mxu0
        %v616 = vadd.f32 %v598, %v615
        %v617 = vpop.f32.mrf.mxu0
        %618 = vdwg.mxu0
        %v619 = vmax.f32 %v616, 0.0
        %v620 = vadd.f32 %v441, %v619
        %v621 = vmul.f32 %v620, %v439
        %v622 = vpack.c.bf16 %v621, %v621
        %623 = vst [vmem:[#allocation2 + $0x4] sm:$0xf] %v622
        %s624 = scalar_lea.vmem %s5, 16
        %v625 = vld [vmem:[%s624] sm:$0xff]
        %v626 = vld [vmem:[%s624 + $0x8] sm:$0xff]
        %v627 = vld [vmem:[#allocation2] sm:$0xff]
        %s628 = scalar_lea.vmem %s4, 24
        %v629 = vld [vmem:[%s628] sm:$0xf]
        %v630 = vld [vmem:[%s628 + $0x4] sm:$0xf]
        %v633 = vunpack.c.l.b16 %v629
        %v634 = vunpack.c.l.b16 %v630
        %v635 = vpack.c.b16 %v634, %v633
        %v637 = vunpack.c.l.b16 %v627
        %v638 = vunpack.c.h.b16 %v627
        %v639 = vpack.c.b16 %v637, %v637
        %v640 = vpack.c.b16 %v638, %v638
        %641 = vrot.lane.b32.xlu0 %v639, 2
        %v642 = vpop.permute.xlu0 %641
        %643 = vrot.lane.b32.xlu0 %v640, 2
        %v644 = vpop.permute.xlu0 %643
        %vm645 = vcmask 15360
        %v646 = vsel %vm645, %v642, %v644
        %v648 = vsel %vm417, %v635, 0
        %v651 = vsel %vm421, %v646, 0
        %653 = vmatpush.bf16.msra.mxu0 0
        %654 = vmatpush.bf16.msra.mxu0 0
        %655 = vmatpush.bf16.msra.mxu0 0
        %656 = vmatpush.bf16.msra.mxu0 0
        %657 = vmatpush.bf16.msra.mxu0 0
        %658 = vmatpush.bf16.msra.mxu0 0
        %659 = vmatpush.bf16.msra.mxu0 0
        %660 = vmatpush.bf16.msra.mxu0 %v651
        %661 = vmatmul.bf16.gmra.mxu0 %v648
        %v662 = vpop.f32.mrf.mxu0
        %v663 = vadd.f32 0.0, %v662
        %v664 = vpop.f32.mrf.mxu0
        %v665 = vadd.f32 0.0, %v664
        %666 = vdwg.mxu0
        %668 = vset.pattern.permute.xlu0 0
        %669 = vperm.xlu0 %668, %v625
        %v670 = vpop.permute.xlu0 %669
        %673 = vset.pattern.permute.xlu0 0
        %674 = vperm.xlu0 %673, %v626
        %v675 = vpop.permute.xlu0 %674
        %v677 = vadd.f32 %v670, %v663
        %v678 = vadd.f32 %v675, %v665
        %v679 = vld [vmem:[#allocation2 + $0x4] sm:$0xf]
        %s680 = scalar_lea.vmem %s4, 32
        %v681 = vld [vmem:[%s680] sm:$0xf]
        %v682 = vld [vmem:[%s680 + $0x4] sm:$0xf]
        %v685 = vunpack.c.l.b16 %v681
        %v686 = vunpack.c.l.b16 %v682
        %v687 = vpack.c.b16 %v686, %v685
        %v689 = vsel %vm417, %v687, 0
        %v692 = vsel %vm421, %v679, 0
        %694 = vmatpush.bf16.msra.mxu0 0
        %695 = vmatpush.bf16.msra.mxu0 0
        %696 = vmatpush.bf16.msra.mxu0 0
        %697 = vmatpush.bf16.msra.mxu0 0
        %698 = vmatpush.bf16.msra.mxu0 0
        %699 = vmatpush.bf16.msra.mxu0 0
        %700 = vmatpush.bf16.msra.mxu0 0
        %701 = vmatpush.bf16.msra.mxu0 %v692
        %702 = vmatmul.bf16.gmra.mxu0 %v689
        %v703 = vpop.f32.mrf.mxu0
        %v704 = vadd.f32 0.0, %v703
        %v705 = vpop.f32.mrf.mxu0
        %v706 = vadd.f32 0.0, %v705
        %707 = vdwg.mxu0
        %v708 = vadd.f32 %v677, %v704
        %v709 = vadd.f32 %v678, %v706
        %v710 = vld [vmem:[#allocation2 + $0x4] sm:$0xff]
        %s711 = scalar_lea.vmem %s4, 40
        %v712 = vld [vmem:[%s711] sm:$0xf]
        %v713 = vld [vmem:[%s711 + $0x4] sm:$0xf]
        %v716 = vunpack.c.l.b16 %v712
        %v717 = vunpack.c.l.b16 %v713
        %v718 = vpack.c.b16 %v717, %v716
        %v720 = vunpack.c.l.b16 %v710
        %v721 = vunpack.c.h.b16 %v710
        %v722 = vpack.c.b16 %v720, %v720
        %v723 = vpack.c.b16 %v721, %v721
        %724 = vrot.lane.b32.xlu0 %v722, 126
        %v725 = vpop.permute.xlu0 %724
        %726 = vrot.lane.b32.xlu0 %v723, 126
        %v727 = vpop.permute.xlu0 %726
        %vm728 = vcmask 1031168
        %v729 = vsel %vm728, %v725, %v727
        %v731 = vsel %vm417, %v718, 0
        %v734 = vsel %vm421, %v729, 0
        %736 = vmatpush.bf16.msra.mxu0 0
        %737 = vmatpush.bf16.msra.mxu0 0
        %738 = vmatpush.bf16.msra.mxu0 0
        %739 = vmatpush.bf16.msra.mxu0 0
        %740 = vmatpush.bf16.msra.mxu0 0
        %741 = vmatpush.bf16.msra.mxu0 0
        %742 = vmatpush.bf16.msra.mxu0 0
        %743 = vmatpush.bf16.msra.mxu0 %v734
        %744 = vmatmul.bf16.gmra.mxu0 %v731
        %v745 = vpop.f32.mrf.mxu0
        %v746 = vadd.f32 0.0, %v745
        %v747 = vpop.f32.mrf.mxu0
        %v748 = vadd.f32 0.0, %v747
        %749 = vdwg.mxu0
        %v750 = vadd.f32 %v708, %v746
        %v751 = vadd.f32 %v709, %v748
        %v752 = vxor.u32 %v751, 2147483648
        %v753 = vmul.f32 %v752, 1.442695
        %v754 = vpow.pop %v753
        %v755 = vadd.f32 %v754, 1.0
        %v756 = vrcp.pop %v755
        %v757 = vmul.f32 %v755, %v756
        %v758 = vsub.f32 1.0, %v757
        %v759 = vmul.f32 %v756, %v758
        %v760 = vadd.f32 %v756, %v759
        %vm761 = vweird.f32 %v755
        %vm762 = vweird.f32 %v756
        %vm763 = vmor %vm761, %vm762
        %v764 = vsel %vm763, %v756, %v760
        %v765 = vand.u32 2147483647, %v755
        %vm766 = vcmp.eq.f32.partialorder %v765, 8.507059e+37
        %v767 = vand.u32 %v755, 2147483648
        %v768 = vor.u32 1.1754944e-38, %v767
        %v769 = vsel %vm766, %v768, %v764
        %v770 = vmul.f32 1.0, %v769
        %v771 = vmul.f32 %v750, %v770
        %s772 = scalar_lea.vmem %s6, 4
        %v773 = vld [vmem:[%s772] sm:$0xf]
        %v774 = vpack.c.bf16 %v771, %v771
        %s775 = scalar_lea.vmem %s7, 8
        %v776 = vld [vmem:[%s775] sm:$0xff]
        %778 = vset.pattern.permute.xlu0 0
        %779 = vperm.xlu0 %778, %v776
        %v780 = vpop.permute.xlu0 %779
        %v783 = vsel %vm417, %v773, 0
        %v786 = vsel %vm421, %v774, 0
        %788 = vmatpush.bf16.msra.mxu0 0
        %789 = vmatpush.bf16.msra.mxu0 0
        %790 = vmatpush.bf16.msra.mxu0 0
        %791 = vmatpush.bf16.msra.mxu0 0
        %792 = vmatpush.bf16.msra.mxu0 0
        %793 = vmatpush.bf16.msra.mxu0 0
        %794 = vmatpush.bf16.msra.mxu0 0
        %795 = vmatpush.bf16.msra.mxu0 %v786
        %796 = vmatmul.bf16.gmra.mxu0 %v783
        %v797 = vpop.f32.mrf.mxu0
        %v798 = vadd.f32 %v780, %v797
        %v799 = vpop.f32.mrf.mxu0
        %800 = vdwg.mxu0
        %v801 = vmax.f32 %v798, 0.0
        %v802 = vadd.f32 %v621, %v801
        %v803 = vmul.f32 %v802, %v439
        %v804 = vpack.c.bf16 %v803, %v803
        %805 = vst [vmem:[#allocation2 + $0x4] sm:$0xf] %v804
        %s806 = scalar_lea.vmem %s5, 32
        %v807 = vld [vmem:[%s806] sm:$0xff]
        %v808 = vld [vmem:[%s806 + $0x8] sm:$0xff]
        %v809 = vld [vmem:[#allocation2] sm:$0xff]
        %s810 = scalar_lea.vmem %s4, 48
        %v811 = vld [vmem:[%s810] sm:$0xf]
        %v812 = vld [vmem:[%s810 + $0x4] sm:$0xf]
        %v815 = vunpack.c.l.b16 %v811
        %v816 = vunpack.c.l.b16 %v812
        %v817 = vpack.c.b16 %v816, %v815
        %v819 = vunpack.c.l.b16 %v809
        %v820 = vunpack.c.h.b16 %v809
        %v821 = vpack.c.b16 %v819, %v819
        %v822 = vpack.c.b16 %v820, %v820
        %823 = vrot.lane.b32.xlu0 %v821, 4
        %v824 = vpop.permute.xlu0 %823
        %825 = vrot.lane.b32.xlu0 %v822, 4
        %v826 = vpop.permute.xlu0 %825
        %vm827 = vcmask 31744
        %v828 = vsel %vm827, %v824, %v826
        %v830 = vsel %vm417, %v817, 0
        %v833 = vsel %vm421, %v828, 0
        %835 = vmatpush.bf16.msra.mxu0 0
        %836 = vmatpush.bf16.msra.mxu0 0
        %837 = vmatpush.bf16.msra.mxu0 0
        %838 = vmatpush.bf16.msra.mxu0 0
        %839 = vmatpush.bf16.msra.mxu0 0
        %840 = vmatpush.bf16.msra.mxu0 0
        %841 = vmatpush.bf16.msra.mxu0 0
        %842 = vmatpush.bf16.msra.mxu0 %v833
        %843 = vmatmul.bf16.gmra.mxu0 %v830
        %v844 = vpop.f32.mrf.mxu0
        %v845 = vadd.f32 0.0, %v844
        %v846 = vpop.f32.mrf.mxu0
        %v847 = vadd.f32 0.0, %v846
        %848 = vdwg.mxu0
        %850 = vset.pattern.permute.xlu0 0
        %851 = vperm.xlu0 %850, %v807
        %v852 = vpop.permute.xlu0 %851
        %855 = vset.pattern.permute.xlu0 0
        %856 = vperm.xlu0 %855, %v808
        %v857 = vpop.permute.xlu0 %856
        %v859 = vadd.f32 %v852, %v845
        %v860 = vadd.f32 %v857, %v847
        %v861 = vld [vmem:[#allocation2 + $0x4] sm:$0xf]
        %s862 = scalar_lea.vmem %s4, 56
        %v863 = vld [vmem:[%s862] sm:$0xf]
        %v864 = vld [vmem:[%s862 + $0x4] sm:$0xf]
        %v867 = vunpack.c.l.b16 %v863
        %v868 = vunpack.c.l.b16 %v864
        %v869 = vpack.c.b16 %v868, %v867
        %v871 = vsel %vm417, %v869, 0
        %v874 = vsel %vm421, %v861, 0
        %876 = vmatpush.bf16.msra.mxu0 0
        %877 = vmatpush.bf16.msra.mxu0 0
        %878 = vmatpush.bf16.msra.mxu0 0
        %879 = vmatpush.bf16.msra.mxu0 0
        %880 = vmatpush.bf16.msra.mxu0 0
        %881 = vmatpush.bf16.msra.mxu0 0
        %882 = vmatpush.bf16.msra.mxu0 0
        %883 = vmatpush.bf16.msra.mxu0 %v874
        %884 = vmatmul.bf16.gmra.mxu0 %v871
        %v885 = vpop.f32.mrf.mxu0
        %v886 = vadd.f32 0.0, %v885
        %v887 = vpop.f32.mrf.mxu0
        %v888 = vadd.f32 0.0, %v887
        %889 = vdwg.mxu0
        %v890 = vadd.f32 %v859, %v886
        %v891 = vadd.f32 %v860, %v888
        %v892 = vld [vmem:[#allocation2 + $0x4] sm:$0xff]
        %s893 = scalar_lea.vmem %s4, 64
        %v894 = vld [vmem:[%s893] sm:$0xf]
        %v895 = vld [vmem:[%s893 + $0x4] sm:$0xf]
        %v898 = vunpack.c.l.b16 %v894
        %v899 = vunpack.c.l.b16 %v895
        %v900 = vpack.c.b16 %v899, %v898
        %v902 = vunpack.c.l.b16 %v892
        %v903 = vunpack.c.h.b16 %v892
        %v904 = vpack.c.b16 %v902, %v902
        %v905 = vpack.c.b16 %v903, %v903
        %906 = vrot.lane.b32.xlu0 %v904, 124
        %v907 = vpop.permute.xlu0 %906
        %908 = vrot.lane.b32.xlu0 %v905, 124
        %v909 = vpop.permute.xlu0 %908
        %vm910 = vcmask 1014784
        %v911 = vsel %vm910, %v907, %v909
        %v913 = vsel %vm417, %v900, 0
        %v916 = vsel %vm421, %v911, 0
        %918 = vmatpush.bf16.msra.mxu0 0
        %919 = vmatpush.bf16.msra.mxu0 0
        %920 = vmatpush.bf16.msra.mxu0 0
        %921 = vmatpush.bf16.msra.mxu0 0
        %922 = vmatpush.bf16.msra.mxu0 0
        %923 = vmatpush.bf16.msra.mxu0 0
        %924 = vmatpush.bf16.msra.mxu0 0
        %925 = vmatpush.bf16.msra.mxu0 %v916
        %926 = vmatmul.bf16.gmra.mxu0 %v913
        %v927 = vpop.f32.mrf.mxu0
        %v928 = vadd.f32 0.0, %v927
        %v929 = vpop.f32.mrf.mxu0
        %v930 = vadd.f32 0.0, %v929
        %931 = vdwg.mxu0
        %v932 = vadd.f32 %v890, %v928
        %v933 = vadd.f32 %v891, %v930
        %v934 = vxor.u32 %v933, 2147483648
        %v935 = vmul.f32 %v934, 1.442695
        %v936 = vpow.pop %v935
        %v937 = vadd.f32 %v936, 1.0
        %v938 = vrcp.pop %v937
        %v939 = vmul.f32 %v937, %v938
        %v940 = vsub.f32 1.0, %v939
        %v941 = vmul.f32 %v938, %v940
        %v942 = vadd.f32 %v938, %v941
        %vm943 = vweird.f32 %v937
        %vm944 = vweird.f32 %v938
        %vm945 = vmor %vm943, %vm944
        %v946 = vsel %vm945, %v938, %v942
        %v947 = vand.u32 2147483647, %v937
        %vm948 = vcmp.eq.f32.partialorder %v947, 8.507059e+37
        %v949 = vand.u32 %v937, 2147483648
        %v950 = vor.u32 1.1754944e-38, %v949
        %v951 = vsel %vm948, %v950, %v946
        %v952 = vmul.f32 1.0, %v951
        %v953 = vmul.f32 %v932, %v952
        %s954 = scalar_lea.vmem %s6, 8
        %v955 = vld [vmem:[%s954] sm:$0xf]
        %v956 = vpack.c.bf16 %v953, %v953
        %s957 = scalar_lea.vmem %s7, 16
        %v958 = vld [vmem:[%s957] sm:$0xff]
        %960 = vset.pattern.permute.xlu0 0
        %961 = vperm.xlu0 %960, %v958
        %v962 = vpop.permute.xlu0 %961
        %v965 = vsel %vm417, %v955, 0
        %v968 = vsel %vm421, %v956, 0
        %970 = vmatpush.bf16.msra.mxu0 0
        %971 = vmatpush.bf16.msra.mxu0 0
        %972 = vmatpush.bf16.msra.mxu0 0
        %973 = vmatpush.bf16.msra.mxu0 0
        %974 = vmatpush.bf16.msra.mxu0 0
        %975 = vmatpush.bf16.msra.mxu0 0
        %976 = vmatpush.bf16.msra.mxu0 0
        %977 = vmatpush.bf16.msra.mxu0 %v968
        %978 = vmatmul.bf16.gmra.mxu0 %v965
        %v979 = vpop.f32.mrf.mxu0
        %v980 = vadd.f32 %v962, %v979
        %v981 = vpop.f32.mrf.mxu0
        %982 = vdwg.mxu0
        %v983 = vmax.f32 %v980, 0.0
        %v984 = vadd.f32 %v803, %v983
        %v985 = vmul.f32 %v984, %v439
        %v986 = vmul.f32 %v985, %v439
        %987 = vst [vmem:[%s399] sm:$0xff] %v986
        %v988 = vld [vmem:[%s8] sm:$0x3]
        %v989 = vpack.c.bf16 %v985, %v985
        %v990 = vld [vmem:[%s9] sm:$0xf]
        %992 = vset.pattern.permute.xlu0 0
        %993 = vperm.xlu0 %992, %v990
        %v994 = vpop.permute.xlu0 %993
        %v997 = vsel %vm417, %v988, 0
        %v1000 = vsel %vm421, %v989, 0
        %1002 = vmatpush.bf16.msra.mxu0 0
        %1003 = vmatpush.bf16.msra.mxu0 0
        %1004 = vmatpush.bf16.msra.mxu0 0
        %1005 = vmatpush.bf16.msra.mxu0 0
        %1006 = vmatpush.bf16.msra.mxu0 0
        %1007 = vmatpush.bf16.msra.mxu0 0
        %1008 = vmatpush.bf16.msra.mxu0 0
        %1009 = vmatpush.bf16.msra.mxu0 %v1000
        %1010 = vmatmul.bf16.gmra.mxu0 %v997
        %v1011 = vpop.f32.mrf.mxu0
        %v1012 = vadd.f32 %v994, %v1011
        %v1013 = vpop.f32.mrf.mxu0
        %1014 = vdwg.mxu0
        %v1015 = vmul.f32 %v1012, %v439
        %1016 = vst [vmem:[%s392] sm:$0xf] %v1015
        %s1017 = sand.u32 %s257, 1
        %s1018 = scalar_lea.sflag [#allocation4], %s1017
        %s1019 = sand.u32 %s257, 1
        %s1020 = smul.addr %s1019, 4
        %s1021 = scalar_lea.vmem [#allocation3], %s1020
        %s1022 = sand.u32 %s283, 1
        %s1023 = scalar_lea.sflag [#allocation6], %s1022
        %s1024 = sand.u32 %s283, 1
        %s1025 = smul.addr %s1024, 8
        %s1026 = scalar_lea.vmem [#allocation5], %s1025
        // Predicated region
        $region61: #{tpu_custom_call.1} parent=59 // pred_check
          %p1027 = pneg %p267
        $region62: #{tpu_custom_call.1} parent=59 // pred_check_branch
          %1029 = sbr.rel (%p1027) target = $region64
        $region63: #{tpu_custom_call.1} parent=59 // pred_region
          %1031 = vsyncadd %s1018, 0
          %s1032 = smul.addr %s29, 4
          %s1033 = scalar_lea.hbm %s10, %s1032
          %s1035 = sshll.u32 %s1021, 4
          %s1036 = int_to_ptr.vmem [resolvable:$true] %s1035
          %s1037 = sshll.u32 %s1033, 4
          %s1038 = int_to_ptr.hbm [resolvable:$true] %s1037
          %1040 = dma.vmem_to_hbm [thread:$0]  %s1036, 64, %s1038, %s1018
        $region64: #{tpu_custom_call.1} parent=59 // pred_fallthru
          _
        // Predicated region
        $region65: #{tpu_custom_call.1} parent=59 // pred_check
          %p1041 = pneg %p293
        $region66: #{tpu_custom_call.1} parent=59 // pred_check_branch
          %1043 = sbr.rel (%p1041) target = $region68
        $region67: #{tpu_custom_call.1} parent=59 // pred_region
          %1045 = vsyncadd %s1023, 0
          %s1046 = smul.addr %s29, 8
          %s1047 = scalar_lea.hbm %s11, %s1046
          %s1049 = sshll.u32 %s1026, 4
          %s1050 = int_to_ptr.vmem [resolvable:$true] %s1049
          %s1051 = sshll.u32 %s1047, 4
          %s1052 = int_to_ptr.hbm [resolvable:$true] %s1051
          %1054 = dma.vmem_to_hbm [thread:$0]  %s1050, 128, %s1052, %s1023
        $region68: #{tpu_custom_call.1} parent=59 // pred_fallthru
          _
      $region60: #{tpu_custom_call.1} parent=5 // pred_fallthru
        _
      %p1055 = scmp.le.s32.totalorder 2, %s24
      // Predicated region
      $region69: #{tpu_custom_call.1} parent=5 // pred_check
        %p1056 = pneg %p1055
      $region70: #{tpu_custom_call.1} parent=5 // pred_check_branch
        %1058 = sbr.rel (%p1056) target = $region72
      $region71: #{tpu_custom_call.1} parent=5 // pred_region
        %s1059 = ssub.s32 %s24, 2
        // Predicated region
        $region73: #{tpu_custom_call.1} parent=71 // pred_check
          %p1060 = pneg %p273
        $region74: #{tpu_custom_call.1} parent=71 // pred_check_branch
          %1062 = sbr.rel (%p1060) target = $region76
        $region75: #{tpu_custom_call.1} parent=71 // pred_region
          %s1063 = sand.u32 %s258, 1
          %s1064 = scalar_lea.sflag [#allocation4], %s1063
          %s1065 = sand.u32 %s258, 1
          %s1066 = smul.addr %s1065, 4
          %s1067 = scalar_lea.vmem [#allocation3], %s1066
          %1069 = dma.done %s1064, 64
        $region76: #{tpu_custom_call.1} parent=71 // pred_fallthru
          _
        // Predicated region
        $region77: #{tpu_custom_call.1} parent=71 // pred_check
          %p1070 = pneg %p299
        $region78: #{tpu_custom_call.1} parent=71 // pred_check_branch
          %1072 = sbr.rel (%p1070) target = $region80
        $region79: #{tpu_custom_call.1} parent=71 // pred_region
          %s1073 = sand.u32 %s284, 1
          %s1074 = scalar_lea.sflag [#allocation6], %s1073
          %s1075 = sand.u32 %s284, 1
          %s1076 = smul.addr %s1075, 8
          %s1077 = scalar_lea.vmem [#allocation5], %s1076
          %1079 = dma.done %s1074, 128
        $region80: #{tpu_custom_call.1} parent=71 // pred_fallthru
          _
      $region72: #{tpu_custom_call.1} parent=5 // pred_fallthru
        _
    $region6: #{tpu_custom_call.1} parent=1 // loop_footer
      %s28 = sadd.s32 1, %s24
    $region7: #{tpu_custom_call.1} parent=1 // loop_footer_branch
      %23 = sbr.rel target = $region3
    $region8: #{tpu_custom_call.1} parent=1 // loop_exit
      _
    %1080 = vsyncpa [#allocation4], 1
    %s1081 = scalar_lea.sflag [#allocation4], 1
    %1082 = vsyncpa %s1081, 1
    %1083 = vsyncpa [#allocation6], 1
    %s1084 = scalar_lea.sflag [#allocation6], 1
    %1085 = vsyncpa %s1084, 1

</llo_original>
